<compile_context>
chip_gen: v7x
topology: tpu7x:2x2x1
jax: 0.10.0
libtpu: 0.0.40
codegen_flags: <defaults>
</compile_context>

<pallas_src>
import math

import jax
import jax.numpy as jnp
import numpy as np
from jax.experimental import pallas as pl
from jax.experimental.pallas import tpu as pltpu

# ---------------------------------------------------------------------------
# Hyper-parameters consistent with the module __init__.
# ---------------------------------------------------------------------------
VOCAB_SIZE = 50
EMBED_DIM = 16
LSTM_HIDDEN = 32
LSTM_LAYERS = 2          # kernel specialized to 2 layers (fused L0 + reverse-only L1)
META_SIZE = 4
FC_HIDDEN = 32
OUTPUT_SIZE = 3
PAD_IDX = 1
BATCH = 8                # fills the 8-sublane dimension (perf review)
SEQ_LEN = 8


def _round8(n):
    return -(-n // 8) * 8


def param_layout(E, H, META):
    """Row offsets of every parameter piece inside the single (rows, 8H) param slab."""
    H2 = 2 * H
    rows = {}
    r = 0
    rows["w_ih0"] = r; r += 2 * E          # (2E, 8H) block-diag fused input proj
    rows["w_hh0"] = r; r += H2             # (2H, 8H) block-diag fused hidden proj
    rows["b0"] = r;    r += 1              # (1, 8H)
    r = _round8(r)
    rows["w_ih1"] = r; r += H2             # (2H, 4H) layer-1 reverse input proj
    rows["w_hh1"] = r; r += H              # (H, 4H)
    rows["b1"] = r;    r += 1              # (1, 4H)
    r = _round8(r)
    rows["w_om"] = r;  r += _round8(META)  # (META, OUT) meta -> logits
    rows["w_cmb"] = r; r += H              # (H, OUT)  fc folded into hidden2out
    rows["b_out"] = r; r += 1              # (1, OUT)
    total = _round8(r)
    return rows, total


# ---------------------------------------------------------------------------
# Pallas kernel
# ---------------------------------------------------------------------------
def make_kernel(T, B, E, H, META, OUT):
    H2, H4, H8 = 2 * H, 4 * H, 8 * H
    prow, _ = param_layout(E, H, META)
    dc_x, dc_mask, dc_meta = 0, 2 * E, 2 * E + 2 * H

    def kernel(data_ref, param_ref, out_ref):
        # ---- unpack parameter slab (static, tile-aligned slices) -------------------
        w_ih0 = param_ref[prow["w_ih0"]:prow["w_ih0"] + 2 * E, :]        # (2E, 8H)
        w_hh0 = param_ref[prow["w_hh0"]:prow["w_hh0"] + H2, :]           # (2H, 8H)
        b0 = param_ref[prow["b0"]:prow["b0"] + 1, :]                     # (1, 8H)
        w_ih1 = param_ref[prow["w_ih1"]:prow["w_ih1"] + H2, 0:H4]        # (2H, 4H)
        w_hh1 = param_ref[prow["w_hh1"]:prow["w_hh1"] + H, 0:H4]         # (H, 4H)
        b1 = param_ref[prow["b1"]:prow["b1"] + 1, 0:H4]                  # (1, 4H)
        w_om = param_ref[prow["w_om"]:prow["w_om"] + META, 0:OUT]        # (META, OUT)
        w_cmb = param_ref[prow["w_cmb"]:prow["w_cmb"] + H, 0:OUT]        # (H, OUT)
        b_out = param_ref[prow["b_out"]:prow["b_out"] + 1, 0:OUT]        # (1, OUT)

        # ---- unpack data slab (time-major, row r = t*B + b) -------------------------
        data = data_ref[...]                                             # (T*B, 128)
        xf = data[:, dc_x:dc_x + 2 * E]                                  # (T*B, 2E)  [x(t)|x(T-1-t)]
        mask_b = data[:, dc_mask:dc_mask + H2] > 0.5                     # (T*B, 2H)  hoisted compare
        meta = data[0:B, dc_meta:dc_meta + META]                         # (B, META)

        # ========== layer 0: forward + backward fused in ONE 8-step loop =============
        # Gate columns interleaved [i_f,i_b,f_f,f_b,g_f,g_b,o_f,o_b]; the block-diagonal
        # input weight already pairs x(t) with x(T-1-t), so gx0 row-block t carries both
        # directions' gate inputs.  g-gate columns are pre-scaled x2: tanh(x)=2*sigmoid(2x)-1.
        gx0 = jnp.dot(xf, w_ih0, preferred_element_type=jnp.float32) + b0    # (T*B, 8H)

        # TODO(synk): per perf review, hold w_hh0/w_hh1 in the MXU across the unrolled
        # steps via pltpu.matmul_push_rhs/matmul_acc_lhs/matmul_pop (and MRB accumulate
        # on v7x); kept as jnp.dot here for portable, clean lowering across generations.
        h = jnp.zeros((B, H2), jnp.float32)
        c = jnp.zeros((B, H2), jnp.float32)
        seq_f = [None] * T
        seq_b = [None] * T
        for t in range(T):                           # fully unrolled; h/c stay vreg-resident
            g = gx0[t * B:(t + 1) * B, :] + jnp.dot(
                h, w_hh0, preferred_element_type=jnp.float32)
            sg = jax.nn.sigmoid(g)                   # single EUP pass over all 8H lanes
            i_g, f_g = sg[:, 0:H2], sg[:, H2:2 * H2]
            g_g = 2.0 * sg[:, 2 * H2:3 * H2] - 1.0   # = tanh(pre-gate); x2 folded into weights
            o_g = sg[:, 3 * H2:4 * H2]
            c_new = f_g * c + i_g * g_g
            h_new = o_g * jnp.tanh(c_new)
            mb = mask_b[t * B:(t + 1) * B, :]
            h = jnp.where(mb, h_new, h)              # packed-sequence: freeze at padding
            c = jnp.where(mb, c_new, c)
            seq_f[t] = h[:, 0:H]                     # fwd output at time t
            seq_b[T - 1 - t] = h[:, H:H2]            # bwd output at time T-1-t

        # ========== layer 1: only the REVERSE direction feeds hn[-1] ==================
        # Layer-0 outputs stay in vregs; layer-1 input projection is a single matmul.
        x1 = jnp.concatenate(
            [jnp.concatenate([seq_f[t], seq_b[t]], axis=1) for t in range(T)], axis=0)
        gx1 = jnp.dot(x1, w_ih1, preferred_element_type=jnp.float32) + b1    # (T*B, 4H)

        h1 = jnp.zeros((B, H), jnp.float32)
        c1 = jnp.zeros((B, H), jnp.float32)
        for t in range(T - 1, -1, -1):               # fully unrolled reverse recurrence
            g = gx1[t * B:(t + 1) * B, :] + jnp.dot(
                h1, w_hh1, preferred_element_type=jnp.float32)
            sg = jax.nn.sigmoid(g)
            i_g, f_g = sg[:, 0:H], sg[:, H:2 * H]
            g_g = 2.0 * sg[:, 2 * H:3 * H] - 1.0
            o_g = sg[:, 3 * H:4 * H]
            c_new = f_g * c1 + i_g * g_g
            h_new = o_g * jnp.tanh(c_new)
            mb = mask_b[t * B:(t + 1) * B, 0:H]
            h1 = jnp.where(mb, h_new, h1)
            c1 = jnp.where(mb, c_new, c1)

        # ========== classifier head (fc folded into hidden2out; dropout = identity) ===
        # TODO(synk): training-mode dropout not implemented; the affine fold is only
        # exact in eval mode.
        logits = (jnp.dot(meta, w_om, preferred_element_type=jnp.float32)
                  + jnp.dot(h1, w_cmb, preferred_element_type=jnp.float32)
                  + b_out)
        out_ref[...] = logits.astype(out_ref.dtype)

    return kernel


# ---------------------------------------------------------------------------
# Wrapper (glue): embedding gather, mask, slab packing, pallas_call.
# ---------------------------------------------------------------------------
def lstm_classifier_forward(meta, text, params):
    assert LSTM_LAYERS == 2, "kernel specialized to 2 layers (fused L0 + reverse-only L1)"
    B, T = text.shape
    H, E = LSTM_HIDDEN, EMBED_DIM
    META, OUT = META_SIZE, OUTPUT_SIZE
    H2, H4, H8 = 2 * H, 4 * H, 8 * H

    embeds = jnp.take(params["embedding"], text.astype(jnp.int32), axis=0)   # (B, T, E)
    valid = (text != PAD_IDX).astype(jnp.float32)                            # (B, T)

    # ---- data slab: time-major rows (r = t*B + b), [x_fused | mask_fused | meta] lanes
    x_tm = jnp.transpose(embeds, (1, 0, 2)).astype(jnp.float32)              # (T, B, E)
    x_fused = jnp.concatenate([x_tm, x_tm[::-1]], axis=-1).reshape(T * B, 2 * E)
    vt = jnp.transpose(valid, (1, 0))                                        # (T, B)
    mask_fused = jnp.concatenate(
        [jnp.broadcast_to(vt[:, :, None], (T, B, H)),
         jnp.broadcast_to(vt[::-1][:, :, None], (T, B, H))], axis=-1,
    ).reshape(T * B, 2 * H)

    data_w = max(128, _round8(2 * E + 2 * H + META))
    data_slab = jnp.zeros((T * B, data_w), jnp.float32)
    data_slab = data_slab.at[:, 0:2 * E].set(x_fused)
    data_slab = data_slab.at[:, 2 * E:2 * E + 2 * H].set(mask_fused)
    data_slab = data_slab.at[0:B, 2 * E + 2 * H:2 * E + 2 * H + META].set(
        meta.astype(jnp.float32))

    # ---- parameter packing ---------------------------------------------------------
    def interleave_gate_cols(wf, wb):   # (X,4H),(X,4H) -> (X,8H) [i_f,i_b,f_f,f_b,g_f,g_b,o_f,o_b]
        return jnp.concatenate(
            [w[:, k * H:(k + 1) * H] for k in range(4) for w in (wf, wb)], axis=1)

    def prescale_g(pack, gstart, gsize):   # fold tanh(x)=2*sigmoid(2x)-1 weight x2
        return jnp.concatenate(
            [pack[:, :gstart], 2.0 * pack[:, gstart:gstart + gsize],
             pack[:, gstart + gsize:]], axis=1)

    w_ih_f, w_hh_f, b_ih_f, b_hh_f = params["lstm"][0]   # layer 0, forward
    w_ih_b, w_hh_b, b_ih_b, b_hh_b = params["lstm"][1]   # layer 0, reverse
    zE = jnp.zeros((E, 4 * H), jnp.float32)
    zH = jnp.zeros((H, 4 * H), jnp.float32)
    w_ih0 = interleave_gate_cols(jnp.concatenate([w_ih_f.T, zE], axis=0),
                                 jnp.concatenate([zE, w_ih_b.T], axis=0))    # (2E, 8H)
    w_hh0 = interleave_gate_cols(jnp.concatenate([w_hh_f.T, zH], axis=0),
                                 jnp.concatenate([zH, w_hh_b.T], axis=0))    # (2H, 8H)
    b0 = interleave_gate_cols((b_ih_f + b_hh_f)[None, :], (b_ih_b + b_hh_b)[None, :])
    lstm0 = prescale_g(jnp.concatenate([w_ih0, w_hh0, b0], axis=0), 4 * H, 2 * H)

    # layer-1: only the reverse direction is live (hn[-1]); forward direction dropped.
    w_ih_r, w_hh_r, b_ih_r, b_hh_r = params["lstm"][2 * (LSTM_LAYERS - 1) + 1]
    lstm1 = prescale_g(jnp.concatenate(
        [w_ih_r.T, w_hh_r.T, (b_ih_r + b_hh_r)[None, :]], axis=0), 2 * H, H)  # (3H+1, 4H)

    # fc folded into hidden2out (eval mode, no nonlinearity between them).
    Wm = params["out_w"][:, :META].T                       # (META, OUT)
    Wf = params["out_w"][:, META:].T                       # (FC, OUT)
    w_cmb = params["fc_w"].T @ Wf                          # (H, OUT)
    b_cmb = (params["fc_b"] @ Wf + params["out_b"])[None, :]  # (1, OUT)

    prow, total_rows = param_layout(E, H, META)
    param_slab = jnp.zeros((total_rows, H8), jnp.float32)

    def put(slab, name, arr):
        r = prow[name]
        return slab.at[r:r + arr.shape[0], 0:arr.shape[1]].set(arr)

    param_slab = put(param_slab, "w_ih0", lstm0[0:2 * E, :])
    param_slab = put(param_slab, "w_hh0", lstm0[2 * E:2 * E + H2, :])
    param_slab = put(param_slab, "b0", lstm0[2 * E + H2:2 * E + H2 + 1, :])
    param_slab = put(param_slab, "w_ih1", lstm1[0:H2, :])
    param_slab = put(param_slab, "w_hh1", lstm1[H2:H2 + H, :])
    param_slab = put(param_slab, "b1", lstm1[H2 + H:H2 + H + 1, :])
    param_slab = put(param_slab, "w_om", Wm)
    param_slab = put(param_slab, "w_cmb", w_cmb)
    param_slab = put(param_slab, "b_out", b_cmb)

    kernel = make_kernel(T, B, E, H, META, OUT)

    # NOTE(v7x): grid=() runs on one TensorCore; if batch grows well past 8 sequences,
    # add a batch grid axis with dimension_semantics=("parallel",) to use both cores.
    return pl.pallas_call(
        kernel,
        out_shape=jax.ShapeDtypeStruct((B, OUT), jnp.float32),
        in_specs=[pl.BlockSpec(memory_space=pltpu.MemorySpace.VMEM)] * 2,
        out_specs=pl.BlockSpec(memory_space=pltpu.MemorySpace.VMEM),
    )(data_slab, param_slab)


# ---------------------------------------------------------------------------
# Deterministic parameter init (shapes follow the PyTorch module __init__).
# ---------------------------------------------------------------------------
def init_params(key):
    ks = iter(jax.random.split(key, 64))
    params = {}
    emb = jax.random.normal(next(ks), (VOCAB_SIZE, EMBED_DIM), jnp.float32)
    params["embedding"] = emb.at[PAD_IDX].set(0.0)  # padding_idx row is zero
    bound = 1.0 / math.sqrt(LSTM_HIDDEN)
    lstm = []
    for layer in range(LSTM_LAYERS):
        din = EMBED_DIM if layer == 0 else 2 * LSTM_HIDDEN
        for _direction in range(2):
            w_ih = jax.random.uniform(next(ks), (4 * LSTM_HIDDEN, din), jnp.float32, -bound, bound)
            w_hh = jax.random.uniform(next(ks), (4 * LSTM_HIDDEN, LSTM_HIDDEN), jnp.float32, -bound, bound)
            b_ih = jax.random.uniform(next(ks), (4 * LSTM_HIDDEN,), jnp.float32, -bound, bound)
            b_hh = jax.random.uniform(next(ks), (4 * LSTM_HIDDEN,), jnp.float32, -bound, bound)
            lstm.append((w_ih, w_hh, b_ih, b_hh))
    params["lstm"] = lstm
    bfc = 1.0 / math.sqrt(LSTM_HIDDEN)
    params["fc_w"] = jax.random.uniform(next(ks), (FC_HIDDEN, LSTM_HIDDEN), jnp.float32, -bfc, bfc)
    params["fc_b"] = jax.random.uniform(next(ks), (FC_HIDDEN,), jnp.float32, -bfc, bfc)
    bo = 1.0 / math.sqrt(META_SIZE + FC_HIDDEN)
    params["out_w"] = jax.random.uniform(next(ks), (OUTPUT_SIZE, META_SIZE + FC_HIDDEN), jnp.float32, -bo, bo)
    params["out_b"] = jax.random.uniform(next(ks), (OUTPUT_SIZE,), jnp.float32, -bo, bo)
    return params


# ---------------------------------------------------------------------------
# Pure-JAX reference (same math, no Pallas) for validation.
# ---------------------------------------------------------------------------
def reference_forward(meta, text, params):
    B, T = text.shape
    H = LSTM_HIDDEN
    x = jnp.take(params["embedding"], text.astype(jnp.int32), axis=0)  # (B, T, E)
    mask = (text != PAD_IDX).astype(jnp.float32)
    h_bwd_last = None
    for layer in range(LSTM_LAYERS):
        outs = []
        for direction in range(2):
            w_ih, w_hh, b_ih, b_hh = params["lstm"][2 * layer + direction]
            h = jnp.zeros((B, H)); c = jnp.zeros((B, H))
            seq = [None] * T
            order = range(T) if direction == 0 else range(T - 1, -1, -1)
            for t in order:
                g = x[:, t, :] @ w_ih.T + h @ w_hh.T + b_ih + b_hh
                i_g = jax.nn.sigmoid(g[:, :H]); f_g = jax.nn.sigmoid(g[:, H:2 * H])
                g_g = jnp.tanh(g[:, 2 * H:3 * H]); o_g = jax.nn.sigmoid(g[:, 3 * H:])
                c_new = f_g * c + i_g * g_g
                h_new = o_g * jnp.tanh(c_new)
                m = mask[:, t][:, None]
                h = m * h_new + (1.0 - m) * h
                c = m * c_new + (1.0 - m) * c
                seq[t] = h
            outs.append(jnp.stack(seq, axis=1))  # (B, T, H)
            if direction == 1:
                h_bwd_last = h
        x = jnp.concatenate(outs, axis=-1)
    fc_out = h_bwd_last @ params["fc_w"].T + params["fc_b"]
    z = jnp.concatenate([meta, fc_out], axis=1)
    return z @ params["out_w"].T + params["out_b"]


if __name__ == "__main__":
    key = jax.random.PRNGKey(0)
    k_meta, k_tok = jax.random.split(key)
    params = init_params(jax.random.PRNGKey(1234))

    # Decreasing lengths (pack_padded_sequence default enforce_sorted=True).
    lens = np.array([8, 8, 7, 6, 5, 4, 3, 2], dtype=np.int64)
    tokens = jax.random.randint(k_tok, (BATCH, SEQ_LEN), 2, VOCAB_SIZE, dtype=jnp.int32)
    pos = np.arange(SEQ_LEN)[None, :]
    text = jnp.where(jnp.asarray(pos < lens[:, None]), tokens, PAD_IDX)
    meta = jax.random.normal(k_meta, (BATCH, META_SIZE), jnp.float32)

    out = jax.block_until_ready(lstm_classifier_forward(meta, text, params))

    ref = reference_forward(meta, text, params)
    np.testing.assert_allclose(np.asarray(out), np.asarray(ref), rtol=1e-4, atol=1e-4)
    print("KERNEL_OK")
</pallas_src>

<mosaic_0001>
module attributes {stable_mosaic.version = 11 : i64} {
  func.func @kernel(%arg0: memref<64x128xf32, #tpu.memory_space<vmem>>, %arg1: memref<256x256xf32, #tpu.memory_space<vmem>>, %arg2: memref<8x3xf32, #tpu.memory_space<vmem>>) attributes {dimension_semantics = [], scalar_prefetch = 0 : i64, scratch_operands = 0 : i64, tpu.core_type = #tpu.core_type<tc>} {
    %c0 = arith.constant 0 : index
    %c0_0 = arith.constant 0 : index
    %0 = vector.load %arg1[%c0, %c0_0] : memref<256x256xf32, #tpu.memory_space<vmem>>, vector<32x256xf32>
    %c32 = arith.constant 32 : index
    %c0_1 = arith.constant 0 : index
    %1 = vector.load %arg1[%c32, %c0_1] : memref<256x256xf32, #tpu.memory_space<vmem>>, vector<64x256xf32>
    %c96 = arith.constant 96 : index
    %c0_2 = arith.constant 0 : index
    %2 = vector.load %arg1[%c96, %c0_2] : memref<256x256xf32, #tpu.memory_space<vmem>>, vector<1x256xf32>
    %c104 = arith.constant 104 : index
    %c0_3 = arith.constant 0 : index
    %3 = vector.load %arg1[%c104, %c0_3] : memref<256x256xf32, #tpu.memory_space<vmem>>, vector<64x128xf32>
    %c168 = arith.constant 168 : index
    %c0_4 = arith.constant 0 : index
    %4 = vector.load %arg1[%c168, %c0_4] : memref<256x256xf32, #tpu.memory_space<vmem>>, vector<32x128xf32>
    %c200 = arith.constant 200 : index
    %c0_5 = arith.constant 0 : index
    %5 = vector.load %arg1[%c200, %c0_5] : memref<256x256xf32, #tpu.memory_space<vmem>>, vector<1x128xf32>
    %c208 = arith.constant 208 : index
    %c0_6 = arith.constant 0 : index
    %6 = vector.load %arg1[%c208, %c0_6] : memref<256x256xf32, #tpu.memory_space<vmem>>, vector<4x3xf32>
    %c216 = arith.constant 216 : index
    %c0_7 = arith.constant 0 : index
    %7 = vector.load %arg1[%c216, %c0_7] : memref<256x256xf32, #tpu.memory_space<vmem>>, vector<32x3xf32>
    %c248 = arith.constant 248 : index
    %c0_8 = arith.constant 0 : index
    %8 = vector.load %arg1[%c248, %c0_8] : memref<256x256xf32, #tpu.memory_space<vmem>>, vector<1x3xf32>
    %c0_9 = arith.constant 0 : index
    %c0_10 = arith.constant 0 : index
    %9 = vector.load %arg0[%c0_9, %c0_10] : memref<64x128xf32, #tpu.memory_space<vmem>>, vector<64x128xf32>
    %10 = vector.extract_strided_slice %9 {offsets = [0, 0], sizes = [64, 32], strides = [1, 1]} : vector<64x128xf32> to vector<64x32xf32>
    %11 = vector.extract_strided_slice %9 {offsets = [0, 32], sizes = [64, 64], strides = [1, 1]} : vector<64x128xf32> to vector<64x64xf32>
    %cst = arith.constant 5.000000e-01 : f32
    %12 = vector.broadcast %cst : f32 to vector<64x64xf32>
    %13 = arith.cmpf ogt, %11, %12 : vector<64x64xf32>
    %14 = vector.extract_strided_slice %9 {offsets = [0, 96], sizes = [8, 4], strides = [1, 1]} : vector<64x128xf32> to vector<8x4xf32>
    %cst_11 = arith.constant dense<0.000000e+00> : vector<64x256xf32>
    %15 = tpu.matmul %10, %0, %cst_11 {dimension_numbers = #tpu.dot_dimension_numbers<[1], [0], [0], [1], [0, 0, 1, 1], [], []>} : vector<64x32xf32>, vector<32x256xf32>, vector<64x256xf32> -> vector<64x256xf32>
    %16 = vector.broadcast %2 : vector<1x256xf32> to vector<64x256xf32>
    %17 = arith.addf %15, %16 : vector<64x256xf32>
    %cst_12 = arith.constant 0.000000e+00 : f32
    %18 = vector.broadcast %cst_12 : f32 to vector<8x64xf32>
    %cst_13 = arith.constant 0.000000e+00 : f32
    %19 = vector.broadcast %cst_13 : f32 to vector<8x64xf32>
    %20 = vector.extract_strided_slice %17 {offsets = [0, 0], sizes = [8, 256], strides = [1, 1]} : vector<64x256xf32> to vector<8x256xf32>
    %cst_14 = arith.constant dense<0.000000e+00> : vector<8x256xf32>
    %21 = tpu.matmul %18, %1, %cst_14 {dimension_numbers = #tpu.dot_dimension_numbers<[1], [0], [0], [1], [0, 0, 1, 1], [], []>} : vector<8x64xf32>, vector<64x256xf32>, vector<8x256xf32> -> vector<8x256xf32>
    %22 = arith.addf %20, %21 : vector<8x256xf32>
    %23 = arith.negf %22 : vector<8x256xf32>
    %24 = math.exp %23 : vector<8x256xf32>
    %cst_15 = arith.constant 1.000000e+00 : f32
    %25 = vector.broadcast %cst_15 : f32 to vector<8x256xf32>
    %26 = arith.addf %25, %24 : vector<8x256xf32>
    %27 = arith.divf %25, %26 : vector<8x256xf32>
    %28 = vector.extract_strided_slice %27 {offsets = [0, 0], sizes = [8, 64], strides = [1, 1]} : vector<8x256xf32> to vector<8x64xf32>
    %29 = vector.extract_strided_slice %27 {offsets = [0, 64], sizes = [8, 64], strides = [1, 1]} : vector<8x256xf32> to vector<8x64xf32>
    %30 = vector.extract_strided_slice %27 {offsets = [0, 128], sizes = [8, 64], strides = [1, 1]} : vector<8x256xf32> to vector<8x64xf32>
    %cst_16 = arith.constant 2.000000e+00 : f32
    %31 = vector.broadcast %cst_16 : f32 to vector<8x64xf32>
    %32 = arith.mulf %31, %30 : vector<8x64xf32>
    %cst_17 = arith.constant 1.000000e+00 : f32
    %33 = vector.broadcast %cst_17 : f32 to vector<8x64xf32>
    %34 = arith.subf %32, %33 : vector<8x64xf32>
    %35 = vector.extract_strided_slice %27 {offsets = [0, 192], sizes = [8, 64], strides = [1, 1]} : vector<8x256xf32> to vector<8x64xf32>
    %36 = arith.mulf %29, %19 : vector<8x64xf32>
    %37 = arith.mulf %28, %34 : vector<8x64xf32>
    %38 = arith.addf %36, %37 : vector<8x64xf32>
    %39 = math.tanh %38 : vector<8x64xf32>
    %40 = arith.mulf %35, %39 : vector<8x64xf32>
    %41 = vector.extract_strided_slice %13 {offsets = [0, 0], sizes = [8, 64], strides = [1, 1]} : vector<64x64xi1> to vector<8x64xi1>
    %42 = arith.select %41, %40, %18 : vector<8x64xi1>, vector<8x64xf32>
    %43 = arith.select %41, %38, %19 : vector<8x64xi1>, vector<8x64xf32>
    %44 = vector.extract_strided_slice %42 {offsets = [0, 0], sizes = [8, 32], strides = [1, 1]} : vector<8x64xf32> to vector<8x32xf32>
    %45 = vector.extract_strided_slice %42 {offsets = [0, 32], sizes = [8, 32], strides = [1, 1]} : vector<8x64xf32> to vector<8x32xf32>
    %46 = vector.extract_strided_slice %17 {offsets = [8, 0], sizes = [8, 256], strides = [1, 1]} : vector<64x256xf32> to vector<8x256xf32>
    %cst_18 = arith.constant dense<0.000000e+00> : vector<8x256xf32>
    %47 = tpu.matmul %42, %1, %cst_18 {dimension_numbers = #tpu.dot_dimension_numbers<[1], [0], [0], [1], [0, 0, 1, 1], [], []>} : vector<8x64xf32>, vector<64x256xf32>, vector<8x256xf32> -> vector<8x256xf32>
    %48 = arith.addf %46, %47 : vector<8x256xf32>
    %49 = arith.negf %48 : vector<8x256xf32>
    %50 = math.exp %49 : vector<8x256xf32>
    %cst_19 = arith.constant 1.000000e+00 : f32
    %51 = vector.broadcast %cst_19 : f32 to vector<8x256xf32>
    %52 = arith.addf %51, %50 : vector<8x256xf32>
    %53 = arith.divf %51, %52 : vector<8x256xf32>
    %54 = vector.extract_strided_slice %53 {offsets = [0, 0], sizes = [8, 64], strides = [1, 1]} : vector<8x256xf32> to vector<8x64xf32>
    %55 = vector.extract_strided_slice %53 {offsets = [0, 64], sizes = [8, 64], strides = [1, 1]} : vector<8x256xf32> to vector<8x64xf32>
    %56 = vector.extract_strided_slice %53 {offsets = [0, 128], sizes = [8, 64], strides = [1, 1]} : vector<8x256xf32> to vector<8x64xf32>
    %cst_20 = arith.constant 2.000000e+00 : f32
    %57 = vector.broadcast %cst_20 : f32 to vector<8x64xf32>
    %58 = arith.mulf %57, %56 : vector<8x64xf32>
    %cst_21 = arith.constant 1.000000e+00 : f32
    %59 = vector.broadcast %cst_21 : f32 to vector<8x64xf32>
    %60 = arith.subf %58, %59 : vector<8x64xf32>
    %61 = vector.extract_strided_slice %53 {offsets = [0, 192], sizes = [8, 64], strides = [1, 1]} : vector<8x256xf32> to vector<8x64xf32>
    %62 = arith.mulf %55, %43 : vector<8x64xf32>
    %63 = arith.mulf %54, %60 : vector<8x64xf32>
    %64 = arith.addf %62, %63 : vector<8x64xf32>
    %65 = math.tanh %64 : vector<8x64xf32>
    %66 = arith.mulf %61, %65 : vector<8x64xf32>
    %67 = vector.extract_strided_slice %13 {offsets = [8, 0], sizes = [8, 64], strides = [1, 1]} : vector<64x64xi1> to vector<8x64xi1>
    %68 = arith.select %67, %66, %42 : vector<8x64xi1>, vector<8x64xf32>
    %69 = arith.select %67, %64, %43 : vector<8x64xi1>, vector<8x64xf32>
    %70 = vector.extract_strided_slice %68 {offsets = [0, 0], sizes = [8, 32], strides = [1, 1]} : vector<8x64xf32> to vector<8x32xf32>
    %71 = vector.extract_strided_slice %68 {offsets = [0, 32], sizes = [8, 32], strides = [1, 1]} : vector<8x64xf32> to vector<8x32xf32>
    %72 = vector.extract_strided_slice %17 {offsets = [16, 0], sizes = [8, 256], strides = [1, 1]} : vector<64x256xf32> to vector<8x256xf32>
    %cst_22 = arith.constant dense<0.000000e+00> : vector<8x256xf32>
    %73 = tpu.matmul %68, %1, %cst_22 {dimension_numbers = #tpu.dot_dimension_numbers<[1], [0], [0], [1], [0, 0, 1, 1], [], []>} : vector<8x64xf32>, vector<64x256xf32>, vector<8x256xf32> -> vector<8x256xf32>
    %74 = arith.addf %72, %73 : vector<8x256xf32>
    %75 = arith.negf %74 : vector<8x256xf32>
    %76 = math.exp %75 : vector<8x256xf32>
    %cst_23 = arith.constant 1.000000e+00 : f32
    %77 = vector.broadcast %cst_23 : f32 to vector<8x256xf32>
    %78 = arith.addf %77, %76 : vector<8x256xf32>
    %79 = arith.divf %77, %78 : vector<8x256xf32>
    %80 = vector.extract_strided_slice %79 {offsets = [0, 0], sizes = [8, 64], strides = [1, 1]} : vector<8x256xf32> to vector<8x64xf32>
    %81 = vector.extract_strided_slice %79 {offsets = [0, 64], sizes = [8, 64], strides = [1, 1]} : vector<8x256xf32> to vector<8x64xf32>
    %82 = vector.extract_strided_slice %79 {offsets = [0, 128], sizes = [8, 64], strides = [1, 1]} : vector<8x256xf32> to vector<8x64xf32>
    %cst_24 = arith.constant 2.000000e+00 : f32
    %83 = vector.broadcast %cst_24 : f32 to vector<8x64xf32>
    %84 = arith.mulf %83, %82 : vector<8x64xf32>
    %cst_25 = arith.constant 1.000000e+00 : f32
    %85 = vector.broadcast %cst_25 : f32 to vector<8x64xf32>
    %86 = arith.subf %84, %85 : vector<8x64xf32>
    %87 = vector.extract_strided_slice %79 {offsets = [0, 192], sizes = [8, 64], strides = [1, 1]} : vector<8x256xf32> to vector<8x64xf32>
    %88 = arith.mulf %81, %69 : vector<8x64xf32>
    %89 = arith.mulf %80, %86 : vector<8x64xf32>
    %90 = arith.addf %88, %89 : vector<8x64xf32>
    %91 = math.tanh %90 : vector<8x64xf32>
    %92 = arith.mulf %87, %91 : vector<8x64xf32>
    %93 = vector.extract_strided_slice %13 {offsets = [16, 0], sizes = [8, 64], strides = [1, 1]} : vector<64x64xi1> to vector<8x64xi1>
    %94 = arith.select %93, %92, %68 : vector<8x64xi1>, vector<8x64xf32>
    %95 = arith.select %93, %90, %69 : vector<8x64xi1>, vector<8x64xf32>
    %96 = vector.extract_strided_slice %94 {offsets = [0, 0], sizes = [8, 32], strides = [1, 1]} : vector<8x64xf32> to vector<8x32xf32>
    %97 = vector.extract_strided_slice %94 {offsets = [0, 32], sizes = [8, 32], strides = [1, 1]} : vector<8x64xf32> to vector<8x32xf32>
    %98 = vector.extract_strided_slice %17 {offsets = [24, 0], sizes = [8, 256], strides = [1, 1]} : vector<64x256xf32> to vector<8x256xf32>
    %cst_26 = arith.constant dense<0.000000e+00> : vector<8x256xf32>
    %99 = tpu.matmul %94, %1, %cst_26 {dimension_numbers = #tpu.dot_dimension_numbers<[1], [0], [0], [1], [0, 0, 1, 1], [], []>} : vector<8x64xf32>, vector<64x256xf32>, vector<8x256xf32> -> vector<8x256xf32>
    %100 = arith.addf %98, %99 : vector<8x256xf32>
    %101 = arith.negf %100 : vector<8x256xf32>
    %102 = math.exp %101 : vector<8x256xf32>
    %cst_27 = arith.constant 1.000000e+00 : f32
    %103 = vector.broadcast %cst_27 : f32 to vector<8x256xf32>
    %104 = arith.addf %103, %102 : vector<8x256xf32>
    %105 = arith.divf %103, %104 : vector<8x256xf32>
    %106 = vector.extract_strided_slice %105 {offsets = [0, 0], sizes = [8, 64], strides = [1, 1]} : vector<8x256xf32> to vector<8x64xf32>
    %107 = vector.extract_strided_slice %105 {offsets = [0, 64], sizes = [8, 64], strides = [1, 1]} : vector<8x256xf32> to vector<8x64xf32>
    %108 = vector.extract_strided_slice %105 {offsets = [0, 128], sizes = [8, 64], strides = [1, 1]} : vector<8x256xf32> to vector<8x64xf32>
    %cst_28 = arith.constant 2.000000e+00 : f32
    %109 = vector.broadcast %cst_28 : f32 to vector<8x64xf32>
    %110 = arith.mulf %109, %108 : vector<8x64xf32>
    %cst_29 = arith.constant 1.000000e+00 : f32
    %111 = vector.broadcast %cst_29 : f32 to vector<8x64xf32>
    %112 = arith.subf %110, %111 : vector<8x64xf32>
    %113 = vector.extract_strided_slice %105 {offsets = [0, 192], sizes = [8, 64], strides = [1, 1]} : vector<8x256xf32> to vector<8x64xf32>
    %114 = arith.mulf %107, %95 : vector<8x64xf32>
    %115 = arith.mulf %106, %112 : vector<8x64xf32>
    %116 = arith.addf %114, %115 : vector<8x64xf32>
    %117 = math.tanh %116 : vector<8x64xf32>
    %118 = arith.mulf %113, %117 : vector<8x64xf32>
    %119 = vector.extract_strided_slice %13 {offsets = [24, 0], sizes = [8, 64], strides = [1, 1]} : vector<64x64xi1> to vector<8x64xi1>
    %120 = arith.select %119, %118, %94 : vector<8x64xi1>, vector<8x64xf32>
    %121 = arith.select %119, %116, %95 : vector<8x64xi1>, vector<8x64xf32>
    %122 = vector.extract_strided_slice %120 {offsets = [0, 0], sizes = [8, 32], strides = [1, 1]} : vector<8x64xf32> to vector<8x32xf32>
    %123 = vector.extract_strided_slice %120 {offsets = [0, 32], sizes = [8, 32], strides = [1, 1]} : vector<8x64xf32> to vector<8x32xf32>
    %124 = vector.extract_strided_slice %17 {offsets = [32, 0], sizes = [8, 256], strides = [1, 1]} : vector<64x256xf32> to vector<8x256xf32>
    %cst_30 = arith.constant dense<0.000000e+00> : vector<8x256xf32>
    %125 = tpu.matmul %120, %1, %cst_30 {dimension_numbers = #tpu.dot_dimension_numbers<[1], [0], [0], [1], [0, 0, 1, 1], [], []>} : vector<8x64xf32>, vector<64x256xf32>, vector<8x256xf32> -> vector<8x256xf32>
    %126 = arith.addf %124, %125 : vector<8x256xf32>
    %127 = arith.negf %126 : vector<8x256xf32>
    %128 = math.exp %127 : vector<8x256xf32>
    %cst_31 = arith.constant 1.000000e+00 : f32
    %129 = vector.broadcast %cst_31 : f32 to vector<8x256xf32>
    %130 = arith.addf %129, %128 : vector<8x256xf32>
    %131 = arith.divf %129, %130 : vector<8x256xf32>
    %132 = vector.extract_strided_slice %131 {offsets = [0, 0], sizes = [8, 64], strides = [1, 1]} : vector<8x256xf32> to vector<8x64xf32>
    %133 = vector.extract_strided_slice %131 {offsets = [0, 64], sizes = [8, 64], strides = [1, 1]} : vector<8x256xf32> to vector<8x64xf32>
    %134 = vector.extract_strided_slice %131 {offsets = [0, 128], sizes = [8, 64], strides = [1, 1]} : vector<8x256xf32> to vector<8x64xf32>
    %cst_32 = arith.constant 2.000000e+00 : f32
    %135 = vector.broadcast %cst_32 : f32 to vector<8x64xf32>
    %136 = arith.mulf %135, %134 : vector<8x64xf32>
    %cst_33 = arith.constant 1.000000e+00 : f32
    %137 = vector.broadcast %cst_33 : f32 to vector<8x64xf32>
    %138 = arith.subf %136, %137 : vector<8x64xf32>
    %139 = vector.extract_strided_slice %131 {offsets = [0, 192], sizes = [8, 64], strides = [1, 1]} : vector<8x256xf32> to vector<8x64xf32>
    %140 = arith.mulf %133, %121 : vector<8x64xf32>
    %141 = arith.mulf %132, %138 : vector<8x64xf32>
    %142 = arith.addf %140, %141 : vector<8x64xf32>
    %143 = math.tanh %142 : vector<8x64xf32>
    %144 = arith.mulf %139, %143 : vector<8x64xf32>
    %145 = vector.extract_strided_slice %13 {offsets = [32, 0], sizes = [8, 64], strides = [1, 1]} : vector<64x64xi1> to vector<8x64xi1>
    %146 = arith.select %145, %144, %120 : vector<8x64xi1>, vector<8x64xf32>
    %147 = arith.select %145, %142, %121 : vector<8x64xi1>, vector<8x64xf32>
    %148 = vector.extract_strided_slice %146 {offsets = [0, 0], sizes = [8, 32], strides = [1, 1]} : vector<8x64xf32> to vector<8x32xf32>
    %149 = vector.extract_strided_slice %146 {offsets = [0, 32], sizes = [8, 32], strides = [1, 1]} : vector<8x64xf32> to vector<8x32xf32>
    %150 = vector.extract_strided_slice %17 {offsets = [40, 0], sizes = [8, 256], strides = [1, 1]} : vector<64x256xf32> to vector<8x256xf32>
    %cst_34 = arith.constant dense<0.000000e+00> : vector<8x256xf32>
    %151 = tpu.matmul %146, %1, %cst_34 {dimension_numbers = #tpu.dot_dimension_numbers<[1], [0], [0], [1], [0, 0, 1, 1], [], []>} : vector<8x64xf32>, vector<64x256xf32>, vector<8x256xf32> -> vector<8x256xf32>
    %152 = arith.addf %150, %151 : vector<8x256xf32>
    %153 = arith.negf %152 : vector<8x256xf32>
    %154 = math.exp %153 : vector<8x256xf32>
    %cst_35 = arith.constant 1.000000e+00 : f32
    %155 = vector.broadcast %cst_35 : f32 to vector<8x256xf32>
    %156 = arith.addf %155, %154 : vector<8x256xf32>
    %157 = arith.divf %155, %156 : vector<8x256xf32>
    %158 = vector.extract_strided_slice %157 {offsets = [0, 0], sizes = [8, 64], strides = [1, 1]} : vector<8x256xf32> to vector<8x64xf32>
    %159 = vector.extract_strided_slice %157 {offsets = [0, 64], sizes = [8, 64], strides = [1, 1]} : vector<8x256xf32> to vector<8x64xf32>
    %160 = vector.extract_strided_slice %157 {offsets = [0, 128], sizes = [8, 64], strides = [1, 1]} : vector<8x256xf32> to vector<8x64xf32>
    %cst_36 = arith.constant 2.000000e+00 : f32
    %161 = vector.broadcast %cst_36 : f32 to vector<8x64xf32>
    %162 = arith.mulf %161, %160 : vector<8x64xf32>
    %cst_37 = arith.constant 1.000000e+00 : f32
    %163 = vector.broadcast %cst_37 : f32 to vector<8x64xf32>
    %164 = arith.subf %162, %163 : vector<8x64xf32>
    %165 = vector.extract_strided_slice %157 {offsets = [0, 192], sizes = [8, 64], strides = [1, 1]} : vector<8x256xf32> to vector<8x64xf32>
    %166 = arith.mulf %159, %147 : vector<8x64xf32>
    %167 = arith.mulf %158, %164 : vector<8x64xf32>
    %168 = arith.addf %166, %167 : vector<8x64xf32>
    %169 = math.tanh %168 : vector<8x64xf32>
    %170 = arith.mulf %165, %169 : vector<8x64xf32>
    %171 = vector.extract_strided_slice %13 {offsets = [40, 0], sizes = [8, 64], strides = [1, 1]} : vector<64x64xi1> to vector<8x64xi1>
    %172 = arith.select %171, %170, %146 : vector<8x64xi1>, vector<8x64xf32>
    %173 = arith.select %171, %168, %147 : vector<8x64xi1>, vector<8x64xf32>
    %174 = vector.extract_strided_slice %172 {offsets = [0, 0], sizes = [8, 32], strides = [1, 1]} : vector<8x64xf32> to vector<8x32xf32>
    %175 = vector.extract_strided_slice %172 {offsets = [0, 32], sizes = [8, 32], strides = [1, 1]} : vector<8x64xf32> to vector<8x32xf32>
    %176 = vector.extract_strided_slice %17 {offsets = [48, 0], sizes = [8, 256], strides = [1, 1]} : vector<64x256xf32> to vector<8x256xf32>
    %cst_38 = arith.constant dense<0.000000e+00> : vector<8x256xf32>
    %177 = tpu.matmul %172, %1, %cst_38 {dimension_numbers = #tpu.dot_dimension_numbers<[1], [0], [0], [1], [0, 0, 1, 1], [], []>} : vector<8x64xf32>, vector<64x256xf32>, vector<8x256xf32> -> vector<8x256xf32>
    %178 = arith.addf %176, %177 : vector<8x256xf32>
    %179 = arith.negf %178 : vector<8x256xf32>
    %180 = math.exp %179 : vector<8x256xf32>
    %cst_39 = arith.constant 1.000000e+00 : f32
    %181 = vector.broadcast %cst_39 : f32 to vector<8x256xf32>
    %182 = arith.addf %181, %180 : vector<8x256xf32>
    %183 = arith.divf %181, %182 : vector<8x256xf32>
    %184 = vector.extract_strided_slice %183 {offsets = [0, 0], sizes = [8, 64], strides = [1, 1]} : vector<8x256xf32> to vector<8x64xf32>
    %185 = vector.extract_strided_slice %183 {offsets = [0, 64], sizes = [8, 64], strides = [1, 1]} : vector<8x256xf32> to vector<8x64xf32>
    %186 = vector.extract_strided_slice %183 {offsets = [0, 128], sizes = [8, 64], strides = [1, 1]} : vector<8x256xf32> to vector<8x64xf32>
    %cst_40 = arith.constant 2.000000e+00 : f32
    %187 = vector.broadcast %cst_40 : f32 to vector<8x64xf32>
    %188 = arith.mulf %187, %186 : vector<8x64xf32>
    %cst_41 = arith.constant 1.000000e+00 : f32
    %189 = vector.broadcast %cst_41 : f32 to vector<8x64xf32>
    %190 = arith.subf %188, %189 : vector<8x64xf32>
    %191 = vector.extract_strided_slice %183 {offsets = [0, 192], sizes = [8, 64], strides = [1, 1]} : vector<8x256xf32> to vector<8x64xf32>
    %192 = arith.mulf %185, %173 : vector<8x64xf32>
    %193 = arith.mulf %184, %190 : vector<8x64xf32>
    %194 = arith.addf %192, %193 : vector<8x64xf32>
    %195 = math.tanh %194 : vector<8x64xf32>
    %196 = arith.mulf %191, %195 : vector<8x64xf32>
    %197 = vector.extract_strided_slice %13 {offsets = [48, 0], sizes = [8, 64], strides = [1, 1]} : vector<64x64xi1> to vector<8x64xi1>
    %198 = arith.select %197, %196, %172 : vector<8x64xi1>, vector<8x64xf32>
    %199 = arith.select %197, %194, %173 : vector<8x64xi1>, vector<8x64xf32>
    %200 = vector.extract_strided_slice %198 {offsets = [0, 0], sizes = [8, 32], strides = [1, 1]} : vector<8x64xf32> to vector<8x32xf32>
    %201 = vector.extract_strided_slice %198 {offsets = [0, 32], sizes = [8, 32], strides = [1, 1]} : vector<8x64xf32> to vector<8x32xf32>
    %202 = vector.extract_strided_slice %17 {offsets = [56, 0], sizes = [8, 256], strides = [1, 1]} : vector<64x256xf32> to vector<8x256xf32>
    %cst_42 = arith.constant dense<0.000000e+00> : vector<8x256xf32>
    %203 = tpu.matmul %198, %1, %cst_42 {dimension_numbers = #tpu.dot_dimension_numbers<[1], [0], [0], [1], [0, 0, 1, 1], [], []>} : vector<8x64xf32>, vector<64x256xf32>, vector<8x256xf32> -> vector<8x256xf32>
    %204 = arith.addf %202, %203 : vector<8x256xf32>
    %205 = arith.negf %204 : vector<8x256xf32>
    %206 = math.exp %205 : vector<8x256xf32>
    %cst_43 = arith.constant 1.000000e+00 : f32
    %207 = vector.broadcast %cst_43 : f32 to vector<8x256xf32>
    %208 = arith.addf %207, %206 : vector<8x256xf32>
    %209 = arith.divf %207, %208 : vector<8x256xf32>
    %210 = vector.extract_strided_slice %209 {offsets = [0, 0], sizes = [8, 64], strides = [1, 1]} : vector<8x256xf32> to vector<8x64xf32>
    %211 = vector.extract_strided_slice %209 {offsets = [0, 64], sizes = [8, 64], strides = [1, 1]} : vector<8x256xf32> to vector<8x64xf32>
    %212 = vector.extract_strided_slice %209 {offsets = [0, 128], sizes = [8, 64], strides = [1, 1]} : vector<8x256xf32> to vector<8x64xf32>
    %cst_44 = arith.constant 2.000000e+00 : f32
    %213 = vector.broadcast %cst_44 : f32 to vector<8x64xf32>
    %214 = arith.mulf %213, %212 : vector<8x64xf32>
    %cst_45 = arith.constant 1.000000e+00 : f32
    %215 = vector.broadcast %cst_45 : f32 to vector<8x64xf32>
    %216 = arith.subf %214, %215 : vector<8x64xf32>
    %217 = vector.extract_strided_slice %209 {offsets = [0, 192], sizes = [8, 64], strides = [1, 1]} : vector<8x256xf32> to vector<8x64xf32>
    %218 = arith.mulf %211, %199 : vector<8x64xf32>
    %219 = arith.mulf %210, %216 : vector<8x64xf32>
    %220 = arith.addf %218, %219 : vector<8x64xf32>
    %221 = math.tanh %220 : vector<8x64xf32>
    %222 = arith.mulf %217, %221 : vector<8x64xf32>
    %223 = vector.extract_strided_slice %13 {offsets = [56, 0], sizes = [8, 64], strides = [1, 1]} : vector<64x64xi1> to vector<8x64xi1>
    %224 = arith.select %223, %222, %198 : vector<8x64xi1>, vector<8x64xf32>
    %225 = vector.extract_strided_slice %224 {offsets = [0, 0], sizes = [8, 32], strides = [1, 1]} : vector<8x64xf32> to vector<8x32xf32>
    %226 = vector.extract_strided_slice %224 {offsets = [0, 32], sizes = [8, 32], strides = [1, 1]} : vector<8x64xf32> to vector<8x32xf32>
    %227 = tpu.concatenate %44, %226 in 1 : vector<8x32xf32>, vector<8x32xf32> -> vector<8x64xf32>
    %228 = tpu.concatenate %70, %201 in 1 : vector<8x32xf32>, vector<8x32xf32> -> vector<8x64xf32>
    %229 = tpu.concatenate %96, %175 in 1 : vector<8x32xf32>, vector<8x32xf32> -> vector<8x64xf32>
    %230 = tpu.concatenate %122, %149 in 1 : vector<8x32xf32>, vector<8x32xf32> -> vector<8x64xf32>
    %231 = tpu.concatenate %148, %123 in 1 : vector<8x32xf32>, vector<8x32xf32> -> vector<8x64xf32>
    %232 = tpu.concatenate %174, %97 in 1 : vector<8x32xf32>, vector<8x32xf32> -> vector<8x64xf32>
    %233 = tpu.concatenate %200, %71 in 1 : vector<8x32xf32>, vector<8x32xf32> -> vector<8x64xf32>
    %234 = tpu.concatenate %225, %45 in 1 : vector<8x32xf32>, vector<8x32xf32> -> vector<8x64xf32>
    %235 = tpu.concatenate %227, %228, %229, %230, %231, %232, %233, %234 in 0 : vector<8x64xf32>, vector<8x64xf32>, vector<8x64xf32>, vector<8x64xf32>, vector<8x64xf32>, vector<8x64xf32>, vector<8x64xf32>, vector<8x64xf32> -> vector<64x64xf32>
    %cst_46 = arith.constant dense<0.000000e+00> : vector<64x128xf32>
    %236 = tpu.matmul %235, %3, %cst_46 {dimension_numbers = #tpu.dot_dimension_numbers<[1], [0], [0], [1], [0, 0, 1, 1], [], []>} : vector<64x64xf32>, vector<64x128xf32>, vector<64x128xf32> -> vector<64x128xf32>
    %237 = vector.broadcast %5 : vector<1x128xf32> to vector<64x128xf32>
    %238 = arith.addf %236, %237 : vector<64x128xf32>
    %cst_47 = arith.constant 0.000000e+00 : f32
    %239 = vector.broadcast %cst_47 : f32 to vector<8x32xf32>
    %cst_48 = arith.constant 0.000000e+00 : f32
    %240 = vector.broadcast %cst_48 : f32 to vector<8x32xf32>
    %241 = vector.extract_strided_slice %238 {offsets = [56, 0], sizes = [8, 128], strides = [1, 1]} : vector<64x128xf32> to vector<8x128xf32>
    %cst_49 = arith.constant dense<0.000000e+00> : vector<8x128xf32>
    %242 = tpu.matmul %239, %4, %cst_49 {dimension_numbers = #tpu.dot_dimension_numbers<[1], [0], [0], [1], [0, 0, 1, 1], [], []>} : vector<8x32xf32>, vector<32x128xf32>, vector<8x128xf32> -> vector<8x128xf32>
    %243 = arith.addf %241, %242 : vector<8x128xf32>
    %244 = arith.negf %243 : vector<8x128xf32>
    %245 = math.exp %244 : vector<8x128xf32>
    %cst_50 = arith.constant 1.000000e+00 : f32
    %246 = vector.broadcast %cst_50 : f32 to vector<8x128xf32>
    %247 = arith.addf %246, %245 : vector<8x128xf32>
    %248 = arith.divf %246, %247 : vector<8x128xf32>
    %249 = vector.extract_strided_slice %248 {offsets = [0, 0], sizes = [8, 32], strides = [1, 1]} : vector<8x128xf32> to vector<8x32xf32>
    %250 = vector.extract_strided_slice %248 {offsets = [0, 32], sizes = [8, 32], strides = [1, 1]} : vector<8x128xf32> to vector<8x32xf32>
    %251 = vector.extract_strided_slice %248 {offsets = [0, 64], sizes = [8, 32], strides = [1, 1]} : vector<8x128xf32> to vector<8x32xf32>
    %cst_51 = arith.constant 2.000000e+00 : f32
    %252 = vector.broadcast %cst_51 : f32 to vector<8x32xf32>
    %253 = arith.mulf %252, %251 : vector<8x32xf32>
    %cst_52 = arith.constant 1.000000e+00 : f32
    %254 = vector.broadcast %cst_52 : f32 to vector<8x32xf32>
    %255 = arith.subf %253, %254 : vector<8x32xf32>
    %256 = vector.extract_strided_slice %248 {offsets = [0, 96], sizes = [8, 32], strides = [1, 1]} : vector<8x128xf32> to vector<8x32xf32>
    %257 = arith.mulf %250, %240 : vector<8x32xf32>
    %258 = arith.mulf %249, %255 : vector<8x32xf32>
    %259 = arith.addf %257, %258 : vector<8x32xf32>
    %260 = math.tanh %259 : vector<8x32xf32>
    %261 = arith.mulf %256, %260 : vector<8x32xf32>
    %262 = vector.extract_strided_slice %13 {offsets = [56, 0], sizes = [8, 32], strides = [1, 1]} : vector<64x64xi1> to vector<8x32xi1>
    %263 = arith.select %262, %261, %239 : vector<8x32xi1>, vector<8x32xf32>
    %264 = arith.select %262, %259, %240 : vector<8x32xi1>, vector<8x32xf32>
    %265 = vector.extract_strided_slice %238 {offsets = [48, 0], sizes = [8, 128], strides = [1, 1]} : vector<64x128xf32> to vector<8x128xf32>
    %cst_53 = arith.constant dense<0.000000e+00> : vector<8x128xf32>
    %266 = tpu.matmul %263, %4, %cst_53 {dimension_numbers = #tpu.dot_dimension_numbers<[1], [0], [0], [1], [0, 0, 1, 1], [], []>} : vector<8x32xf32>, vector<32x128xf32>, vector<8x128xf32> -> vector<8x128xf32>
    %267 = arith.addf %265, %266 : vector<8x128xf32>
    %268 = arith.negf %267 : vector<8x128xf32>
    %269 = math.exp %268 : vector<8x128xf32>
    %cst_54 = arith.constant 1.000000e+00 : f32
    %270 = vector.broadcast %cst_54 : f32 to vector<8x128xf32>
    %271 = arith.addf %270, %269 : vector<8x128xf32>
    %272 = arith.divf %270, %271 : vector<8x128xf32>
    %273 = vector.extract_strided_slice %272 {offsets = [0, 0], sizes = [8, 32], strides = [1, 1]} : vector<8x128xf32> to vector<8x32xf32>
    %274 = vector.extract_strided_slice %272 {offsets = [0, 32], sizes = [8, 32], strides = [1, 1]} : vector<8x128xf32> to vector<8x32xf32>
    %275 = vector.extract_strided_slice %272 {offsets = [0, 64], sizes = [8, 32], strides = [1, 1]} : vector<8x128xf32> to vector<8x32xf32>
    %cst_55 = arith.constant 2.000000e+00 : f32
    %276 = vector.broadcast %cst_55 : f32 to vector<8x32xf32>
    %277 = arith.mulf %276, %275 : vector<8x32xf32>
    %cst_56 = arith.constant 1.000000e+00 : f32
    %278 = vector.broadcast %cst_56 : f32 to vector<8x32xf32>
    %279 = arith.subf %277, %278 : vector<8x32xf32>
    %280 = vector.extract_strided_slice %272 {offsets = [0, 96], sizes = [8, 32], strides = [1, 1]} : vector<8x128xf32> to vector<8x32xf32>
    %281 = arith.mulf %274, %264 : vector<8x32xf32>
    %282 = arith.mulf %273, %279 : vector<8x32xf32>
    %283 = arith.addf %281, %282 : vector<8x32xf32>
    %284 = math.tanh %283 : vector<8x32xf32>
    %285 = arith.mulf %280, %284 : vector<8x32xf32>
    %286 = vector.extract_strided_slice %13 {offsets = [48, 0], sizes = [8, 32], strides = [1, 1]} : vector<64x64xi1> to vector<8x32xi1>
    %287 = arith.select %286, %285, %263 : vector<8x32xi1>, vector<8x32xf32>
    %288 = arith.select %286, %283, %264 : vector<8x32xi1>, vector<8x32xf32>
    %289 = vector.extract_strided_slice %238 {offsets = [40, 0], sizes = [8, 128], strides = [1, 1]} : vector<64x128xf32> to vector<8x128xf32>
    %cst_57 = arith.constant dense<0.000000e+00> : vector<8x128xf32>
    %290 = tpu.matmul %287, %4, %cst_57 {dimension_numbers = #tpu.dot_dimension_numbers<[1], [0], [0], [1], [0, 0, 1, 1], [], []>} : vector<8x32xf32>, vector<32x128xf32>, vector<8x128xf32> -> vector<8x128xf32>
    %291 = arith.addf %289, %290 : vector<8x128xf32>
    %292 = arith.negf %291 : vector<8x128xf32>
    %293 = math.exp %292 : vector<8x128xf32>
    %cst_58 = arith.constant 1.000000e+00 : f32
    %294 = vector.broadcast %cst_58 : f32 to vector<8x128xf32>
    %295 = arith.addf %294, %293 : vector<8x128xf32>
    %296 = arith.divf %294, %295 : vector<8x128xf32>
    %297 = vector.extract_strided_slice %296 {offsets = [0, 0], sizes = [8, 32], strides = [1, 1]} : vector<8x128xf32> to vector<8x32xf32>
    %298 = vector.extract_strided_slice %296 {offsets = [0, 32], sizes = [8, 32], strides = [1, 1]} : vector<8x128xf32> to vector<8x32xf32>
    %299 = vector.extract_strided_slice %296 {offsets = [0, 64], sizes = [8, 32], strides = [1, 1]} : vector<8x128xf32> to vector<8x32xf32>
    %cst_59 = arith.constant 2.000000e+00 : f32
    %300 = vector.broadcast %cst_59 : f32 to vector<8x32xf32>
    %301 = arith.mulf %300, %299 : vector<8x32xf32>
    %cst_60 = arith.constant 1.000000e+00 : f32
    %302 = vector.broadcast %cst_60 : f32 to vector<8x32xf32>
    %303 = arith.subf %301, %302 : vector<8x32xf32>
    %304 = vector.extract_strided_slice %296 {offsets = [0, 96], sizes = [8, 32], strides = [1, 1]} : vector<8x128xf32> to vector<8x32xf32>
    %305 = arith.mulf %298, %288 : vector<8x32xf32>
    %306 = arith.mulf %297, %303 : vector<8x32xf32>
    %307 = arith.addf %305, %306 : vector<8x32xf32>
    %308 = math.tanh %307 : vector<8x32xf32>
    %309 = arith.mulf %304, %308 : vector<8x32xf32>
    %310 = vector.extract_strided_slice %13 {offsets = [40, 0], sizes = [8, 32], strides = [1, 1]} : vector<64x64xi1> to vector<8x32xi1>
    %311 = arith.select %310, %309, %287 : vector<8x32xi1>, vector<8x32xf32>
    %312 = arith.select %310, %307, %288 : vector<8x32xi1>, vector<8x32xf32>
    %313 = vector.extract_strided_slice %238 {offsets = [32, 0], sizes = [8, 128], strides = [1, 1]} : vector<64x128xf32> to vector<8x128xf32>
    %cst_61 = arith.constant dense<0.000000e+00> : vector<8x128xf32>
    %314 = tpu.matmul %311, %4, %cst_61 {dimension_numbers = #tpu.dot_dimension_numbers<[1], [0], [0], [1], [0, 0, 1, 1], [], []>} : vector<8x32xf32>, vector<32x128xf32>, vector<8x128xf32> -> vector<8x128xf32>
    %315 = arith.addf %313, %314 : vector<8x128xf32>
    %316 = arith.negf %315 : vector<8x128xf32>
    %317 = math.exp %316 : vector<8x128xf32>
    %cst_62 = arith.constant 1.000000e+00 : f32
    %318 = vector.broadcast %cst_62 : f32 to vector<8x128xf32>
    %319 = arith.addf %318, %317 : vector<8x128xf32>
    %320 = arith.divf %318, %319 : vector<8x128xf32>
    %321 = vector.extract_strided_slice %320 {offsets = [0, 0], sizes = [8, 32], strides = [1, 1]} : vector<8x128xf32> to vector<8x32xf32>
    %322 = vector.extract_strided_slice %320 {offsets = [0, 32], sizes = [8, 32], strides = [1, 1]} : vector<8x128xf32> to vector<8x32xf32>
    %323 = vector.extract_strided_slice %320 {offsets = [0, 64], sizes = [8, 32], strides = [1, 1]} : vector<8x128xf32> to vector<8x32xf32>
    %cst_63 = arith.constant 2.000000e+00 : f32
    %324 = vector.broadcast %cst_63 : f32 to vector<8x32xf32>
    %325 = arith.mulf %324, %323 : vector<8x32xf32>
    %cst_64 = arith.constant 1.000000e+00 : f32
    %326 = vector.broadcast %cst_64 : f32 to vector<8x32xf32>
    %327 = arith.subf %325, %326 : vector<8x32xf32>
    %328 = vector.extract_strided_slice %320 {offsets = [0, 96], sizes = [8, 32], strides = [1, 1]} : vector<8x128xf32> to vector<8x32xf32>
    %329 = arith.mulf %322, %312 : vector<8x32xf32>
    %330 = arith.mulf %321, %327 : vector<8x32xf32>
    %331 = arith.addf %329, %330 : vector<8x32xf32>
    %332 = math.tanh %331 : vector<8x32xf32>
    %333 = arith.mulf %328, %332 : vector<8x32xf32>
    %334 = vector.extract_strided_slice %13 {offsets = [32, 0], sizes = [8, 32], strides = [1, 1]} : vector<64x64xi1> to vector<8x32xi1>
    %335 = arith.select %334, %333, %311 : vector<8x32xi1>, vector<8x32xf32>
    %336 = arith.select %334, %331, %312 : vector<8x32xi1>, vector<8x32xf32>
    %337 = vector.extract_strided_slice %238 {offsets = [24, 0], sizes = [8, 128], strides = [1, 1]} : vector<64x128xf32> to vector<8x128xf32>
    %cst_65 = arith.constant dense<0.000000e+00> : vector<8x128xf32>
    %338 = tpu.matmul %335, %4, %cst_65 {dimension_numbers = #tpu.dot_dimension_numbers<[1], [0], [0], [1], [0, 0, 1, 1], [], []>} : vector<8x32xf32>, vector<32x128xf32>, vector<8x128xf32> -> vector<8x128xf32>
    %339 = arith.addf %337, %338 : vector<8x128xf32>
    %340 = arith.negf %339 : vector<8x128xf32>
    %341 = math.exp %340 : vector<8x128xf32>
    %cst_66 = arith.constant 1.000000e+00 : f32
    %342 = vector.broadcast %cst_66 : f32 to vector<8x128xf32>
    %343 = arith.addf %342, %341 : vector<8x128xf32>
    %344 = arith.divf %342, %343 : vector<8x128xf32>
    %345 = vector.extract_strided_slice %344 {offsets = [0, 0], sizes = [8, 32], strides = [1, 1]} : vector<8x128xf32> to vector<8x32xf32>
    %346 = vector.extract_strided_slice %344 {offsets = [0, 32], sizes = [8, 32], strides = [1, 1]} : vector<8x128xf32> to vector<8x32xf32>
    %347 = vector.extract_strided_slice %344 {offsets = [0, 64], sizes = [8, 32], strides = [1, 1]} : vector<8x128xf32> to vector<8x32xf32>
    %cst_67 = arith.constant 2.000000e+00 : f32
    %348 = vector.broadcast %cst_67 : f32 to vector<8x32xf32>
    %349 = arith.mulf %348, %347 : vector<8x32xf32>
    %cst_68 = arith.constant 1.000000e+00 : f32
    %350 = vector.broadcast %cst_68 : f32 to vector<8x32xf32>
    %351 = arith.subf %349, %350 : vector<8x32xf32>
    %352 = vector.extract_strided_slice %344 {offsets = [0, 96], sizes = [8, 32], strides = [1, 1]} : vector<8x128xf32> to vector<8x32xf32>
    %353 = arith.mulf %346, %336 : vector<8x32xf32>
    %354 = arith.mulf %345, %351 : vector<8x32xf32>
    %355 = arith.addf %353, %354 : vector<8x32xf32>
    %356 = math.tanh %355 : vector<8x32xf32>
    %357 = arith.mulf %352, %356 : vector<8x32xf32>
    %358 = vector.extract_strided_slice %13 {offsets = [24, 0], sizes = [8, 32], strides = [1, 1]} : vector<64x64xi1> to vector<8x32xi1>
    %359 = arith.select %358, %357, %335 : vector<8x32xi1>, vector<8x32xf32>
    %360 = arith.select %358, %355, %336 : vector<8x32xi1>, vector<8x32xf32>
    %361 = vector.extract_strided_slice %238 {offsets = [16, 0], sizes = [8, 128], strides = [1, 1]} : vector<64x128xf32> to vector<8x128xf32>
    %cst_69 = arith.constant dense<0.000000e+00> : vector<8x128xf32>
    %362 = tpu.matmul %359, %4, %cst_69 {dimension_numbers = #tpu.dot_dimension_numbers<[1], [0], [0], [1], [0, 0, 1, 1], [], []>} : vector<8x32xf32>, vector<32x128xf32>, vector<8x128xf32> -> vector<8x128xf32>
    %363 = arith.addf %361, %362 : vector<8x128xf32>
    %364 = arith.negf %363 : vector<8x128xf32>
    %365 = math.exp %364 : vector<8x128xf32>
    %cst_70 = arith.constant 1.000000e+00 : f32
    %366 = vector.broadcast %cst_70 : f32 to vector<8x128xf32>
    %367 = arith.addf %366, %365 : vector<8x128xf32>
    %368 = arith.divf %366, %367 : vector<8x128xf32>
    %369 = vector.extract_strided_slice %368 {offsets = [0, 0], sizes = [8, 32], strides = [1, 1]} : vector<8x128xf32> to vector<8x32xf32>
    %370 = vector.extract_strided_slice %368 {offsets = [0, 32], sizes = [8, 32], strides = [1, 1]} : vector<8x128xf32> to vector<8x32xf32>
    %371 = vector.extract_strided_slice %368 {offsets = [0, 64], sizes = [8, 32], strides = [1, 1]} : vector<8x128xf32> to vector<8x32xf32>
    %cst_71 = arith.constant 2.000000e+00 : f32
    %372 = vector.broadcast %cst_71 : f32 to vector<8x32xf32>
    %373 = arith.mulf %372, %371 : vector<8x32xf32>
    %cst_72 = arith.constant 1.000000e+00 : f32
    %374 = vector.broadcast %cst_72 : f32 to vector<8x32xf32>
    %375 = arith.subf %373, %374 : vector<8x32xf32>
    %376 = vector.extract_strided_slice %368 {offsets = [0, 96], sizes = [8, 32], strides = [1, 1]} : vector<8x128xf32> to vector<8x32xf32>
    %377 = arith.mulf %370, %360 : vector<8x32xf32>
    %378 = arith.mulf %369, %375 : vector<8x32xf32>
    %379 = arith.addf %377, %378 : vector<8x32xf32>
    %380 = math.tanh %379 : vector<8x32xf32>
    %381 = arith.mulf %376, %380 : vector<8x32xf32>
    %382 = vector.extract_strided_slice %13 {offsets = [16, 0], sizes = [8, 32], strides = [1, 1]} : vector<64x64xi1> to vector<8x32xi1>
    %383 = arith.select %382, %381, %359 : vector<8x32xi1>, vector<8x32xf32>
    %384 = arith.select %382, %379, %360 : vector<8x32xi1>, vector<8x32xf32>
    %385 = vector.extract_strided_slice %238 {offsets = [8, 0], sizes = [8, 128], strides = [1, 1]} : vector<64x128xf32> to vector<8x128xf32>
    %cst_73 = arith.constant dense<0.000000e+00> : vector<8x128xf32>
    %386 = tpu.matmul %383, %4, %cst_73 {dimension_numbers = #tpu.dot_dimension_numbers<[1], [0], [0], [1], [0, 0, 1, 1], [], []>} : vector<8x32xf32>, vector<32x128xf32>, vector<8x128xf32> -> vector<8x128xf32>
    %387 = arith.addf %385, %386 : vector<8x128xf32>
    %388 = arith.negf %387 : vector<8x128xf32>
    %389 = math.exp %388 : vector<8x128xf32>
    %cst_74 = arith.constant 1.000000e+00 : f32
    %390 = vector.broadcast %cst_74 : f32 to vector<8x128xf32>
    %391 = arith.addf %390, %389 : vector<8x128xf32>
    %392 = arith.divf %390, %391 : vector<8x128xf32>
    %393 = vector.extract_strided_slice %392 {offsets = [0, 0], sizes = [8, 32], strides = [1, 1]} : vector<8x128xf32> to vector<8x32xf32>
    %394 = vector.extract_strided_slice %392 {offsets = [0, 32], sizes = [8, 32], strides = [1, 1]} : vector<8x128xf32> to vector<8x32xf32>
    %395 = vector.extract_strided_slice %392 {offsets = [0, 64], sizes = [8, 32], strides = [1, 1]} : vector<8x128xf32> to vector<8x32xf32>
    %cst_75 = arith.constant 2.000000e+00 : f32
    %396 = vector.broadcast %cst_75 : f32 to vector<8x32xf32>
    %397 = arith.mulf %396, %395 : vector<8x32xf32>
    %cst_76 = arith.constant 1.000000e+00 : f32
    %398 = vector.broadcast %cst_76 : f32 to vector<8x32xf32>
    %399 = arith.subf %397, %398 : vector<8x32xf32>
    %400 = vector.extract_strided_slice %392 {offsets = [0, 96], sizes = [8, 32], strides = [1, 1]} : vector<8x128xf32> to vector<8x32xf32>
    %401 = arith.mulf %394, %384 : vector<8x32xf32>
    %402 = arith.mulf %393, %399 : vector<8x32xf32>
    %403 = arith.addf %401, %402 : vector<8x32xf32>
    %404 = math.tanh %403 : vector<8x32xf32>
    %405 = arith.mulf %400, %404 : vector<8x32xf32>
    %406 = vector.extract_strided_slice %13 {offsets = [8, 0], sizes = [8, 32], strides = [1, 1]} : vector<64x64xi1> to vector<8x32xi1>
    %407 = arith.select %406, %405, %383 : vector<8x32xi1>, vector<8x32xf32>
    %408 = arith.select %406, %403, %384 : vector<8x32xi1>, vector<8x32xf32>
    %409 = vector.extract_strided_slice %238 {offsets = [0, 0], sizes = [8, 128], strides = [1, 1]} : vector<64x128xf32> to vector<8x128xf32>
    %cst_77 = arith.constant dense<0.000000e+00> : vector<8x128xf32>
    %410 = tpu.matmul %407, %4, %cst_77 {dimension_numbers = #tpu.dot_dimension_numbers<[1], [0], [0], [1], [0, 0, 1, 1], [], []>} : vector<8x32xf32>, vector<32x128xf32>, vector<8x128xf32> -> vector<8x128xf32>
    %411 = arith.addf %409, %410 : vector<8x128xf32>
    %412 = arith.negf %411 : vector<8x128xf32>
    %413 = math.exp %412 : vector<8x128xf32>
    %cst_78 = arith.constant 1.000000e+00 : f32
    %414 = vector.broadcast %cst_78 : f32 to vector<8x128xf32>
    %415 = arith.addf %414, %413 : vector<8x128xf32>
    %416 = arith.divf %414, %415 : vector<8x128xf32>
    %417 = vector.extract_strided_slice %416 {offsets = [0, 0], sizes = [8, 32], strides = [1, 1]} : vector<8x128xf32> to vector<8x32xf32>
    %418 = vector.extract_strided_slice %416 {offsets = [0, 32], sizes = [8, 32], strides = [1, 1]} : vector<8x128xf32> to vector<8x32xf32>
    %419 = vector.extract_strided_slice %416 {offsets = [0, 64], sizes = [8, 32], strides = [1, 1]} : vector<8x128xf32> to vector<8x32xf32>
    %cst_79 = arith.constant 2.000000e+00 : f32
    %420 = vector.broadcast %cst_79 : f32 to vector<8x32xf32>
    %421 = arith.mulf %420, %419 : vector<8x32xf32>
    %cst_80 = arith.constant 1.000000e+00 : f32
    %422 = vector.broadcast %cst_80 : f32 to vector<8x32xf32>
    %423 = arith.subf %421, %422 : vector<8x32xf32>
    %424 = vector.extract_strided_slice %416 {offsets = [0, 96], sizes = [8, 32], strides = [1, 1]} : vector<8x128xf32> to vector<8x32xf32>
    %425 = arith.mulf %418, %408 : vector<8x32xf32>
    %426 = arith.mulf %417, %423 : vector<8x32xf32>
    %427 = arith.addf %425, %426 : vector<8x32xf32>
    %428 = math.tanh %427 : vector<8x32xf32>
    %429 = arith.mulf %424, %428 : vector<8x32xf32>
    %430 = vector.extract_strided_slice %13 {offsets = [0, 0], sizes = [8, 32], strides = [1, 1]} : vector<64x64xi1> to vector<8x32xi1>
    %431 = arith.select %430, %429, %407 : vector<8x32xi1>, vector<8x32xf32>
    %cst_81 = arith.constant dense<0.000000e+00> : vector<8x3xf32>
    %432 = tpu.matmul %14, %6, %cst_81 {dimension_numbers = #tpu.dot_dimension_numbers<[1], [0], [0], [1], [0, 0, 1, 1], [], []>} : vector<8x4xf32>, vector<4x3xf32>, vector<8x3xf32> -> vector<8x3xf32>
    %cst_82 = arith.constant dense<0.000000e+00> : vector<8x3xf32>
    %433 = tpu.matmul %431, %7, %cst_82 {dimension_numbers = #tpu.dot_dimension_numbers<[1], [0], [0], [1], [0, 0, 1, 1], [], []>} : vector<8x32xf32>, vector<32x3xf32>, vector<8x3xf32> -> vector<8x3xf32>
    %434 = arith.addf %432, %433 : vector<8x3xf32>
    %435 = vector.broadcast %8 : vector<1x3xf32> to vector<8x3xf32>
    %436 = arith.addf %434, %435 : vector<8x3xf32>
    %c0_83 = arith.constant 0 : index
    %c0_84 = arith.constant 0 : index
    %437 = vector.load %arg2[%c0_83, %c0_84] : memref<8x3xf32, #tpu.memory_space<vmem>>, vector<8x3xf32>
    tpu.vector_store %arg2[%c0_83, %c0_84], %436 {strides = array<i32>} : memref<8x3xf32, #tpu.memory_space<vmem>>, vector<8x3xf32>,
    return
  }
}

</mosaic_0001>

<llo_original>
// kernel: tpu_custom_call.1
$region0: #{tpu_custom_call.1}
  #allocation0 [shape = 'u32[]', space=smem, size = 0x4, offset = 0x4, fixed_abs, tag = 'smem constant byte address 0x4 - core index']
  #allocation1 [shape = 'u32[144,128]{1,0:T(1,128)}', space=vmem, size = 0x12000, scoped, tag = 'internal scratch']
  %s0 = inlined_call_operand.hbm [shape: f32[64,128], index: 0, kind: input, shape index: {}]
  %s1 = inlined_call_operand.hbm [shape: f32[256,256], index: 1, kind: input, shape index: {}]
  %s2 = inlined_call_operand.vmem [shape: f32[8,3], index: 2, kind: output, shape index: {}]
  %s3 = sld [smem:[#allocation0]]
  $region26: #{tpu_custom_call.1} parent=0
    _
  %s5 = ssub.s32 1, %s3
  %s6 = scalar_select 0, %s5, %s3
  $region1: #{tpu_custom_call.1} parent=0
    #allocation2 [shape = 'u8[32768]{0}', space=vmem, size = 0x8000, scoped, tag = 'input window, operand 0, single buffered']
    #allocation3 [shape = 's32[1]{0}', space=sflag, size = 0x4, scoped, tag = 'scoped memory for tpu_custom_call.1']
    #allocation4 [shape = 'u8[262144]{0}', space=vmem, size = 0x40000, scoped, tag = 'input window, operand 1, single buffered']
    #allocation5 [shape = 's32[1]{0}', space=sflag, size = 0x4, scoped, tag = 'scoped memory for tpu_custom_call.1']
    %7 = vsyncpa [#allocation3], 0
    %8 = vsyncpa [#allocation5], 0
    // Predicated region
    $region2: #{tpu_custom_call.1} parent=1 // pred_check
      _
    $region3: #{tpu_custom_call.1} parent=1 // pred_check_branch
      %10 = sbr.rel (0) target = $region5
    $region4: #{tpu_custom_call.1} parent=1 // pred_region
      %s12 = ssub.s32 1024, 1024
      %13 = vsyncadd [#allocation3], %s12
      %s14 = sshll.u32 [#allocation2], 4
      %s15 = int_to_ptr.vmem [resolvable:$true] %s14
      %20 = dma.hbm_to_vmem [thread:$0]  %s0, 1024, %s15, [#allocation3], 128, 128, 8
    $region5: #{tpu_custom_call.1} parent=1 // pred_fallthru
      _
    // Predicated region
    $region6: #{tpu_custom_call.1} parent=1 // pred_check
      _
    $region7: #{tpu_custom_call.1} parent=1 // pred_check_branch
      %22 = sbr.rel (0) target = $region9
    $region8: #{tpu_custom_call.1} parent=1 // pred_region
      %s24 = ssub.s32 8192, 8192
      %25 = vsyncadd [#allocation5], %s24
      %s26 = sshll.u32 [#allocation4], 4
      %s27 = int_to_ptr.vmem [resolvable:$true] %s26
      %32 = dma.hbm_to_vmem [thread:$0]  %s1, 8192, %s27, [#allocation5], 256, 256, 16
    $region9: #{tpu_custom_call.1} parent=1 // pred_fallthru
      _
    // Predicated region
    $region10: #{tpu_custom_call.1} parent=1 // pred_check
      _
    $region11: #{tpu_custom_call.1} parent=1 // pred_check_branch
      %34 = sbr.rel (0) target = $region13
    $region12: #{tpu_custom_call.1} parent=1 // pred_region
      %35 = dma.done [#allocation3], 1024
    $region13: #{tpu_custom_call.1} parent=1 // pred_fallthru
      _
    // Predicated region
    $region14: #{tpu_custom_call.1} parent=1 // pred_check
      _
    $region15: #{tpu_custom_call.1} parent=1 // pred_check_branch
      %37 = sbr.rel (0) target = $region17
    $region16: #{tpu_custom_call.1} parent=1 // pred_region
      %38 = dma.done [#allocation5], 8192
    $region17: #{tpu_custom_call.1} parent=1 // pred_fallthru
      _
    %v39 = vld [vmem:[#allocation4] sm:$0xff]
    %v40 = vld [vmem:[#allocation4 + $0x8] sm:$0xff]
    %v41 = vld [vmem:[#allocation4 + $0x10] sm:$0xff]
    %v42 = vld [vmem:[#allocation4 + $0x18] sm:$0xff]
    %v43 = vld [vmem:[#allocation4 + $0x20] sm:$0xff]
    %v44 = vld [vmem:[#allocation4 + $0x28] sm:$0xff]
    %v45 = vld [vmem:[#allocation4 + $0x30] sm:$0xff]
    %v46 = vld [vmem:[#allocation4 + $0x38] sm:$0xff]
    %v47 = vld [vmem:[#allocation4 + $0x40] sm:$0xff]
    %v48 = vld [vmem:[#allocation4 + $0x48] sm:$0xff]
    %v49 = vld [vmem:[#allocation4 + $0x50] sm:$0xff]
    %v50 = vld [vmem:[#allocation4 + $0x58] sm:$0xff]
    %v51 = vld [vmem:[#allocation4 + $0x60] sm:$0xff]
    %v52 = vld [vmem:[#allocation4 + $0x68] sm:$0xff]
    %v53 = vld [vmem:[#allocation4 + $0x70] sm:$0xff]
    %v54 = vld [vmem:[#allocation4 + $0x78] sm:$0xff]
    %v55 = vld [vmem:[#allocation4 + $0x80] sm:$0xff]
    %v56 = vld [vmem:[#allocation4 + $0x88] sm:$0xff]
    %v57 = vld [vmem:[#allocation4 + $0x90] sm:$0xff]
    %v58 = vld [vmem:[#allocation4 + $0x98] sm:$0xff]
    %v59 = vld [vmem:[#allocation4 + $0xa0] sm:$0xff]
    %v60 = vld [vmem:[#allocation4 + $0xa8] sm:$0xff]
    %v61 = vld [vmem:[#allocation4 + $0xb0] sm:$0xff]
    %v62 = vld [vmem:[#allocation4 + $0xb8] sm:$0xff]
    %s63 = scalar_lea.vmem [#allocation4], 192
    %v64 = vld [vmem:[%s63] ss:$8 sm:$0x3]
    %v65 = vld [vmem:[#allocation4 + $0xd0] sm:$0xff]
    %v66 = vld [vmem:[#allocation4 + $0xe0] sm:$0xff]
    %v67 = vld [vmem:[#allocation4 + $0xf0] sm:$0xff]
    %v68 = vld [vmem:[#allocation4 + $0x100] sm:$0xff]
    %v69 = vld [vmem:[#allocation4 + $0x110] sm:$0xff]
    %v70 = vld [vmem:[#allocation4 + $0x120] sm:$0xff]
    %v71 = vld [vmem:[#allocation4 + $0x130] sm:$0xff]
    %v72 = vld [vmem:[#allocation4 + $0x140] sm:$0xff]
    %v73 = vld [vmem:[#allocation4 + $0x150] sm:$0xff]
    %v74 = vld [vmem:[#allocation4 + $0x160] sm:$0xff]
    %v75 = vld [vmem:[#allocation4 + $0x170] sm:$0xff]
    %v76 = vld [vmem:[#allocation4 + $0x180] sm:$0xff]
    %v77 = vld [vmem:[#allocation4 + $0x190] ss:$0 sm:$0xff]
    %v78 = vld [vmem:[#allocation4 + $0x1a0] sm:$0xf]
    %v79 = vld [vmem:[#allocation4 + $0x1b0] sm:$0xff]
    %v80 = vld [vmem:[#allocation4 + $0x1c0] sm:$0xff]
    %v81 = vld [vmem:[#allocation4 + $0x1d0] sm:$0xff]
    %v82 = vld [vmem:[#allocation4 + $0x1e0] sm:$0xff]
    %v83 = vld [vmem:[#allocation4 + $0x1f0] ss:$0 sm:$0xff]
    %v84 = vld [vmem:[#allocation2] sm:$0xff]
    %v85 = vld [vmem:[#allocation2 + $0x8] sm:$0xff]
    %v86 = vld [vmem:[#allocation2 + $0x10] sm:$0xff]
    %v87 = vld [vmem:[#allocation2 + $0x18] sm:$0xff]
    %v88 = vld [vmem:[#allocation2 + $0x20] sm:$0xff]
    %v89 = vld [vmem:[#allocation2 + $0x28] sm:$0xff]
    %v90 = vld [vmem:[#allocation2 + $0x30] sm:$0xff]
    %v91 = vld [vmem:[#allocation2 + $0x38] sm:$0xff]
    %vm92 = vcmp.gt.f32.partialorder %v84, 0.5
    %vm93 = vcmp.gt.f32.partialorder %v85, 0.5
    %vm94 = vcmp.gt.f32.partialorder %v86, 0.5
    %vm95 = vcmp.gt.f32.partialorder %v87, 0.5
    %vm96 = vcmp.gt.f32.partialorder %v88, 0.5
    %vm97 = vcmp.gt.f32.partialorder %v89, 0.5
    %vm98 = vcmp.gt.f32.partialorder %v90, 0.5
    %vm99 = vcmp.gt.f32.partialorder %v91, 0.5
    %v101 = vlaneseq
    %v102 = vshrl.u32 %v101, 7
    %v103 = vsub.s32 0, %v102
    %v104 = vrot.slane %v64, %v103
    %v105 = vlaneseq
    %v106 = vshrl.u32 %v105, 7
    %v107 = vsub.s32 1, %v106
    %v108 = vrot.slane %v64, %v107
    %vm111 = vcmask 261120
    %v113 = vsel %vm111, %v84, 0
    %v116 = vsel %vm111, %v85, 0
    %v119 = vsel %vm111, %v86, 0
    %v122 = vsel %vm111, %v87, 0
    %v125 = vsel %vm111, %v88, 0
    %v128 = vsel %vm111, %v89, 0
    %v131 = vsel %vm111, %v90, 0
    %v134 = vsel %vm111, %v91, 0
    %136 = vmatprep.subr.mxu0 %v40
    %137 = vmatpush1.msra.mxu0 %v39
    %138 = vmatprep.subr.mxu0 %v42
    %139 = vmatpush1.msra.mxu0 %v41
    %140 = vmatprep.subr.mxu0 %v44
    %141 = vmatpush1.msra.mxu0 %v43
    %142 = vmatprep.subr.mxu0 %v46
    %143 = vmatpush1.msra.mxu0 %v45
    %144 = vmatprep.subr.mxu0 0.0
    %145 = vmatpush1.msra.mxu0 0.0
    %146 = vmatprep.subr.mxu0 0.0
    %147 = vmatpush1.msra.mxu0 0.0
    %148 = vmatprep.subr.mxu0 0.0
    %149 = vmatpush1.msra.mxu0 0.0
    %150 = vmatprep.subr.mxu0 0.0
    %151 = vmatpush1.msra.mxu0 0.0
    %152 = vmatprep.subr.mxu0 0.0
    %153 = vmatpush1.msra.mxu0 0.0
    %154 = vmatprep.subr.mxu0 0.0
    %155 = vmatpush1.msra.mxu0 0.0
    %156 = vmatprep.subr.mxu0 0.0
    %157 = vmatpush1.msra.mxu0 0.0
    %158 = vmatprep.subr.mxu0 0.0
    %159 = vmatpush1.msra.mxu0 0.0
    %160 = vmatprep.subr.mxu0 0.0
    %161 = vmatpush1.msra.mxu0 0.0
    %162 = vmatprep.subr.mxu0 0.0
    %163 = vmatpush1.msra.mxu0 0.0
    %164 = vmatprep.subr.mxu0 0.0
    %165 = vmatpush1.msra.mxu0 0.0
    %166 = vmatprep.subr.mxu0 0.0
    %167 = vmatpush1.msra.mxu0 0.0
    %168 = vmatprep.subr.mxu0 0.0
    %169 = vmatpush1.msra.mxu0 0.0
    %170 = vmatprep.subr.mxu0 0.0
    %171 = vmatpush1.msra.mxu0 0.0
    %172 = vmatprep.subr.mxu0 0.0
    %173 = vmatpush1.msra.mxu0 0.0
    %174 = vmatprep.subr.mxu0 0.0
    %175 = vmatpush1.msra.mxu0 0.0
    %176 = vmatprep.subr.mxu0 0.0
    %177 = vmatpush1.msra.mxu0 0.0
    %178 = vmatprep.subr.mxu0 0.0
    %179 = vmatpush1.msra.mxu0 0.0
    %180 = vmatprep.subr.mxu0 0.0
    %181 = vmatpush1.msra.mxu0 0.0
    %182 = vmatprep.subr.mxu0 0.0
    %183 = vmatpush1.msra.mxu0 0.0
    %184 = vmatprep.subr.mxu0 0.0
    %185 = vmatpush1.msra.mxu0 0.0
    %186 = vmatprep.subr.mxu0 0.0
    %187 = vmatpush1.msra.mxu0 0.0
    %188 = vmatprep.subr.mxu0 0.0
    %189 = vmatpush1.msra.mxu0 0.0
    %190 = vmatprep.subr.mxu0 0.0
    %191 = vmatpush1.msra.mxu0 0.0
    %192 = vmatprep.subr.mxu0 0.0
    %193 = vmatpush1.msra.mxu0 0.0
    %194 = vmatprep.subr.mxu0 0.0
    %195 = vmatpush1.msra.mxu0 0.0
    %196 = vmatprep.subr.mxu0 0.0
    %197 = vmatpush1.msra.mxu0 0.0
    %198 = vmatprep.subr.mxu0 0.0
    %199 = vmatpush1.msra.mxu0 0.0
    %200 = vmatprep.mubr.f32.mxu0 0.0
    %201 = vmatmul.mubr.f32.gmra.mrb[0].mxu0 %v113
    %v202 = vpop.f32.mrb[0].mxu0
    %v203 = vadd.f32 %v104, %v202
    %v204 = vpop.f32.mrb[0].mxu0
    %v205 = vadd.f32 %v108, %v204
    %206 = vmatprep.mubr.f32.mxu0 0.0
    %207 = vmatmul.mubr.f32.gmra.mrb[0].mxu0 %v116
    %v208 = vpop.f32.mrb[0].mxu0
    %v209 = vadd.f32 %v104, %v208
    %v210 = vpop.f32.mrb[0].mxu0
    %v211 = vadd.f32 %v108, %v210
    %212 = vmatprep.mubr.f32.mxu0 0.0
    %213 = vmatmul.mubr.f32.gmra.mrb[0].mxu0 %v119
    %v214 = vpop.f32.mrb[0].mxu0
    %v215 = vadd.f32 %v104, %v214
    %v216 = vpop.f32.mrb[0].mxu0
    %v217 = vadd.f32 %v108, %v216
    %218 = vmatprep.mubr.f32.mxu0 0.0
    %219 = vmatmul.mubr.f32.gmra.mrb[0].mxu0 %v122
    %v220 = vpop.f32.mrb[0].mxu0
    %v221 = vadd.f32 %v104, %v220
    %v222 = vpop.f32.mrb[0].mxu0
    %v223 = vadd.f32 %v108, %v222
    %224 = vmatprep.mubr.f32.mxu0 0.0
    %225 = vmatmul.mubr.f32.gmra.mrb[0].mxu0 %v125
    %v226 = vpop.f32.mrb[0].mxu0
    %v227 = vadd.f32 %v104, %v226
    %v228 = vpop.f32.mrb[0].mxu0
    %v229 = vadd.f32 %v108, %v228
    %230 = vmatprep.mubr.f32.mxu0 0.0
    %231 = vmatmul.mubr.f32.gmra.mrb[0].mxu0 %v128
    %v232 = vpop.f32.mrb[0].mxu0
    %v233 = vadd.f32 %v104, %v232
    %v234 = vpop.f32.mrb[0].mxu0
    %v235 = vadd.f32 %v108, %v234
    %236 = vmatprep.mubr.f32.mxu0 0.0
    %237 = vmatmul.mubr.f32.gmra.mrb[0].mxu0 %v131
    %v238 = vpop.f32.mrb[0].mxu0
    %v239 = vadd.f32 %v104, %v238
    %v240 = vpop.f32.mrb[0].mxu0
    %v241 = vadd.f32 %v108, %v240
    %242 = vmatprep.mubr.f32.mxu0 0.0
    %243 = vmatmul.mubr.f32.gmra.mrb[0].mxu0 %v134
    %v244 = vpop.f32.mrb[0].mxu0
    %v245 = vadd.f32 %v104, %v244
    %v246 = vpop.f32.mrb[0].mxu0
    %v247 = vadd.f32 %v108, %v246
    %248 = vdwg.mxu0
    %vm249 = vcmask 523264
    %v251 = vsel %vm249, 0.0, 0
    %253 = vmatprep.subr.mxu0 %v48
    %254 = vmatpush1.msra.mxu0 %v47
    %255 = vmatprep.subr.mxu0 %v50
    %256 = vmatpush1.msra.mxu0 %v49
    %257 = vmatprep.subr.mxu0 %v52
    %258 = vmatpush1.msra.mxu0 %v51
    %259 = vmatprep.subr.mxu0 %v54
    %260 = vmatpush1.msra.mxu0 %v53
    %261 = vmatprep.subr.mxu0 %v56
    %262 = vmatpush1.msra.mxu0 %v55
    %263 = vmatprep.subr.mxu0 %v58
    %264 = vmatpush1.msra.mxu0 %v57
    %265 = vmatprep.subr.mxu0 %v60
    %266 = vmatpush1.msra.mxu0 %v59
    %267 = vmatprep.subr.mxu0 %v62
    %268 = vmatpush1.msra.mxu0 %v61
    %269 = vmatprep.subr.mxu0 0.0
    %270 = vmatpush1.msra.mxu0 0.0
    %271 = vmatprep.subr.mxu0 0.0
    %272 = vmatpush1.msra.mxu0 0.0
    %273 = vmatprep.subr.mxu0 0.0
    %274 = vmatpush1.msra.mxu0 0.0
    %275 = vmatprep.subr.mxu0 0.0
    %276 = vmatpush1.msra.mxu0 0.0
    %277 = vmatprep.subr.mxu0 0.0
    %278 = vmatpush1.msra.mxu0 0.0
    %279 = vmatprep.subr.mxu0 0.0
    %280 = vmatpush1.msra.mxu0 0.0
    %281 = vmatprep.subr.mxu0 0.0
    %282 = vmatpush1.msra.mxu0 0.0
    %283 = vmatprep.subr.mxu0 0.0
    %284 = vmatpush1.msra.mxu0 0.0
    %285 = vmatprep.subr.mxu0 0.0
    %286 = vmatpush1.msra.mxu0 0.0
    %287 = vmatprep.subr.mxu0 0.0
    %288 = vmatpush1.msra.mxu0 0.0
    %289 = vmatprep.subr.mxu0 0.0
    %290 = vmatpush1.msra.mxu0 0.0
    %291 = vmatprep.subr.mxu0 0.0
    %292 = vmatpush1.msra.mxu0 0.0
    %293 = vmatprep.subr.mxu0 0.0
    %294 = vmatpush1.msra.mxu0 0.0
    %295 = vmatprep.subr.mxu0 0.0
    %296 = vmatpush1.msra.mxu0 0.0
    %297 = vmatprep.subr.mxu0 0.0
    %298 = vmatpush1.msra.mxu0 0.0
    %299 = vmatprep.subr.mxu0 0.0
    %300 = vmatpush1.msra.mxu0 0.0
    %301 = vmatprep.subr.mxu0 0.0
    %302 = vmatpush1.msra.mxu0 0.0
    %303 = vmatprep.subr.mxu0 0.0
    %304 = vmatpush1.msra.mxu0 0.0
    %305 = vmatprep.subr.mxu0 0.0
    %306 = vmatpush1.msra.mxu0 0.0
    %307 = vmatprep.subr.mxu0 0.0
    %308 = vmatpush1.msra.mxu0 0.0
    %309 = vmatprep.subr.mxu0 0.0
    %310 = vmatpush1.msra.mxu0 0.0
    %311 = vmatprep.subr.mxu0 0.0
    %312 = vmatpush1.msra.mxu0 0.0
    %313 = vmatprep.subr.mxu0 0.0
    %314 = vmatpush1.msra.mxu0 0.0
    %315 = vmatprep.subr.mxu0 0.0
    %316 = vmatpush1.msra.mxu0 0.0
    %317 = vmatprep.mubr.f32.mxu0 0.0
    %318 = vmatmul.mubr.f32.gmra.mrb[0].mxu0 %v251
    %v319 = vpop.f32.mrb[0].mxu0
    %v320 = vadd.f32 0.0, %v319
    %v321 = vpop.f32.mrb[0].mxu0
    %v322 = vadd.f32 0.0, %v321
    %323 = vdwg.mxu0
    %v324 = vadd.f32 %v203, %v320
    %v325 = vadd.f32 %v205, %v322
    %v326 = vxor.u32 %v324, 2147483648
    %v327 = vxor.u32 %v325, 2147483648
    %v328 = vmul.f32 %v326, 1.442695
    %v329 = vpow.pop %v328
    %v330 = vmul.f32 %v327, 1.442695
    %v331 = vpow.pop %v330
    %v332 = vadd.f32 %v329, 1.0
    %v333 = vadd.f32 %v331, 1.0
    %v334 = vrcp.pop %v332
    %v335 = vmul.f32 1.0, %v334
    %v336 = vrcp.pop %v333
    %v337 = vmul.f32 1.0, %v336
    %v338 = vmul.f32 %v337, 2.0
    %v339 = vsub.f32 %v338, 1.0
    %v340 = vmul.f32 %v335, 0.0
    %v341 = vmul.f32 %v335, %v339
    %343 = vrot.lane.b32.xlu0 %v341, 64
    %v344 = vpop.permute.xlu0 %343
    %v346 = vadd.f32 %v340, %v344
    %v347 = vtanh.pop %v346
    %v348 = vmul.f32 %v337, %v347
    %350 = vrot.lane.b32.xlu0 %v348, 96
    %v351 = vpop.permute.xlu0 %350
    %v353 = vsel %vm92, %v351, 0.0
    %355 = vrot.lane.b32.xlu0 %v346, 96
    %v356 = vpop.permute.xlu0 %355
    %v358 = vsel %vm92, %v356, 0.0
    %360 = vrot.lane.b32.xlu0 %v353, 96
    %v361 = vpop.permute.xlu0 %360
    %v362 = vsel %vm249, %v361, 0
    %364 = vmatprep.subr.mxu0 %v48
    %365 = vmatpush1.msra.mxu0 %v47
    %366 = vmatprep.subr.mxu0 %v50
    %367 = vmatpush1.msra.mxu0 %v49
    %368 = vmatprep.subr.mxu0 %v52
    %369 = vmatpush1.msra.mxu0 %v51
    %370 = vmatprep.subr.mxu0 %v54
    %371 = vmatpush1.msra.mxu0 %v53
    %372 = vmatprep.subr.mxu0 %v56
    %373 = vmatpush1.msra.mxu0 %v55
    %374 = vmatprep.subr.mxu0 %v58
    %375 = vmatpush1.msra.mxu0 %v57
    %376 = vmatprep.subr.mxu0 %v60
    %377 = vmatpush1.msra.mxu0 %v59
    %378 = vmatprep.subr.mxu0 %v62
    %379 = vmatpush1.msra.mxu0 %v61
    %380 = vmatprep.subr.mxu0 0.0
    %381 = vmatpush1.msra.mxu0 0.0
    %382 = vmatprep.subr.mxu0 0.0
    %383 = vmatpush1.msra.mxu0 0.0
    %384 = vmatprep.subr.mxu0 0.0
    %385 = vmatpush1.msra.mxu0 0.0
    %386 = vmatprep.subr.mxu0 0.0
    %387 = vmatpush1.msra.mxu0 0.0
    %388 = vmatprep.subr.mxu0 0.0
    %389 = vmatpush1.msra.mxu0 0.0
    %390 = vmatprep.subr.mxu0 0.0
    %391 = vmatpush1.msra.mxu0 0.0
    %392 = vmatprep.subr.mxu0 0.0
    %393 = vmatpush1.msra.mxu0 0.0
    %394 = vmatprep.subr.mxu0 0.0
    %395 = vmatpush1.msra.mxu0 0.0
    %396 = vmatprep.subr.mxu0 0.0
    %397 = vmatpush1.msra.mxu0 0.0
    %398 = vmatprep.subr.mxu0 0.0
    %399 = vmatpush1.msra.mxu0 0.0
    %400 = vmatprep.subr.mxu0 0.0
    %401 = vmatpush1.msra.mxu0 0.0
    %402 = vmatprep.subr.mxu0 0.0
    %403 = vmatpush1.msra.mxu0 0.0
    %404 = vmatprep.subr.mxu0 0.0
    %405 = vmatpush1.msra.mxu0 0.0
    %406 = vmatprep.subr.mxu0 0.0
    %407 = vmatpush1.msra.mxu0 0.0
    %408 = vmatprep.subr.mxu0 0.0
    %409 = vmatpush1.msra.mxu0 0.0
    %410 = vmatprep.subr.mxu0 0.0
    %411 = vmatpush1.msra.mxu0 0.0
    %412 = vmatprep.subr.mxu0 0.0
    %413 = vmatpush1.msra.mxu0 0.0
    %414 = vmatprep.subr.mxu0 0.0
    %415 = vmatpush1.msra.mxu0 0.0
    %416 = vmatprep.subr.mxu0 0.0
    %417 = vmatpush1.msra.mxu0 0.0
    %418 = vmatprep.subr.mxu0 0.0
    %419 = vmatpush1.msra.mxu0 0.0
    %420 = vmatprep.subr.mxu0 0.0
    %421 = vmatpush1.msra.mxu0 0.0
    %422 = vmatprep.subr.mxu0 0.0
    %423 = vmatpush1.msra.mxu0 0.0
    %424 = vmatprep.subr.mxu0 0.0
    %425 = vmatpush1.msra.mxu0 0.0
    %426 = vmatprep.subr.mxu0 0.0
    %427 = vmatpush1.msra.mxu0 0.0
    %428 = vmatprep.mubr.f32.mxu0 0.0
    %429 = vmatmul.mubr.f32.gmra.mrb[0].mxu0 %v362
    %v430 = vpop.f32.mrb[0].mxu0
    %v431 = vadd.f32 0.0, %v430
    %v432 = vpop.f32.mrb[0].mxu0
    %v433 = vadd.f32 0.0, %v432
    %434 = vdwg.mxu0
    %v435 = vadd.f32 %v209, %v431
    %v436 = vadd.f32 %v211, %v433
    %v437 = vxor.u32 %v435, 2147483648
    %v438 = vxor.u32 %v436, 2147483648
    %v439 = vmul.f32 %v437, 1.442695
    %v440 = vpow.pop %v439
    %v441 = vmul.f32 %v438, 1.442695
    %v442 = vpow.pop %v441
    %v443 = vadd.f32 %v440, 1.0
    %v444 = vadd.f32 %v442, 1.0
    %v445 = vrcp.pop %v443
    %v446 = vmul.f32 1.0, %v445
    %v447 = vrcp.pop %v444
    %v448 = vmul.f32 1.0, %v447
    %v449 = vmul.f32 %v448, 2.0
    %v450 = vsub.f32 %v449, 1.0
    %452 = vrot.lane.b32.xlu0 %v358, 32
    %v453 = vpop.permute.xlu0 %452
    %v455 = vmul.f32 %v446, %v453
    %v456 = vmul.f32 %v446, %v450
    %458 = vrot.lane.b32.xlu0 %v456, 64
    %v459 = vpop.permute.xlu0 %458
    %v461 = vadd.f32 %v455, %v459
    %v462 = vtanh.pop %v461
    %v463 = vmul.f32 %v448, %v462
    %465 = vrot.lane.b32.xlu0 %v463, 96
    %v466 = vpop.permute.xlu0 %465
    %v468 = vsel %vm93, %v466, %v353
    %470 = vrot.lane.b32.xlu0 %v461, 96
    %v471 = vpop.permute.xlu0 %470
    %v473 = vsel %vm93, %v471, %v358
    %475 = vrot.lane.b32.xlu0 %v468, 96
    %v476 = vpop.permute.xlu0 %475
    %v477 = vsel %vm249, %v476, 0
    %479 = vmatprep.subr.mxu0 %v48
    %480 = vmatpush1.msra.mxu0 %v47
    %481 = vmatprep.subr.mxu0 %v50
    %482 = vmatpush1.msra.mxu0 %v49
    %483 = vmatprep.subr.mxu0 %v52
    %484 = vmatpush1.msra.mxu0 %v51
    %485 = vmatprep.subr.mxu0 %v54
    %486 = vmatpush1.msra.mxu0 %v53
    %487 = vmatprep.subr.mxu0 %v56
    %488 = vmatpush1.msra.mxu0 %v55
    %489 = vmatprep.subr.mxu0 %v58
    %490 = vmatpush1.msra.mxu0 %v57
    %491 = vmatprep.subr.mxu0 %v60
    %492 = vmatpush1.msra.mxu0 %v59
    %493 = vmatprep.subr.mxu0 %v62
    %494 = vmatpush1.msra.mxu0 %v61
    %495 = vmatprep.subr.mxu0 0.0
    %496 = vmatpush1.msra.mxu0 0.0
    %497 = vmatprep.subr.mxu0 0.0
    %498 = vmatpush1.msra.mxu0 0.0
    %499 = vmatprep.subr.mxu0 0.0
    %500 = vmatpush1.msra.mxu0 0.0
    %501 = vmatprep.subr.mxu0 0.0
    %502 = vmatpush1.msra.mxu0 0.0
    %503 = vmatprep.subr.mxu0 0.0
    %504 = vmatpush1.msra.mxu0 0.0
    %505 = vmatprep.subr.mxu0 0.0
    %506 = vmatpush1.msra.mxu0 0.0
    %507 = vmatprep.subr.mxu0 0.0
    %508 = vmatpush1.msra.mxu0 0.0
    %509 = vmatprep.subr.mxu0 0.0
    %510 = vmatpush1.msra.mxu0 0.0
    %511 = vmatprep.subr.mxu0 0.0
    %512 = vmatpush1.msra.mxu0 0.0
    %513 = vmatprep.subr.mxu0 0.0
    %514 = vmatpush1.msra.mxu0 0.0
    %515 = vmatprep.subr.mxu0 0.0
    %516 = vmatpush1.msra.mxu0 0.0
    %517 = vmatprep.subr.mxu0 0.0
    %518 = vmatpush1.msra.mxu0 0.0
    %519 = vmatprep.subr.mxu0 0.0
    %520 = vmatpush1.msra.mxu0 0.0
    %521 = vmatprep.subr.mxu0 0.0
    %522 = vmatpush1.msra.mxu0 0.0
    %523 = vmatprep.subr.mxu0 0.0
    %524 = vmatpush1.msra.mxu0 0.0
    %525 = vmatprep.subr.mxu0 0.0
    %526 = vmatpush1.msra.mxu0 0.0
    %527 = vmatprep.subr.mxu0 0.0
    %528 = vmatpush1.msra.mxu0 0.0
    %529 = vmatprep.subr.mxu0 0.0
    %530 = vmatpush1.msra.mxu0 0.0
    %531 = vmatprep.subr.mxu0 0.0
    %532 = vmatpush1.msra.mxu0 0.0
    %533 = vmatprep.subr.mxu0 0.0
    %534 = vmatpush1.msra.mxu0 0.0
    %535 = vmatprep.subr.mxu0 0.0
    %536 = vmatpush1.msra.mxu0 0.0
    %537 = vmatprep.subr.mxu0 0.0
    %538 = vmatpush1.msra.mxu0 0.0
    %539 = vmatprep.subr.mxu0 0.0
    %540 = vmatpush1.msra.mxu0 0.0
    %541 = vmatprep.subr.mxu0 0.0
    %542 = vmatpush1.msra.mxu0 0.0
    %543 = vmatprep.mubr.f32.mxu0 0.0
    %544 = vmatmul.mubr.f32.gmra.mrb[0].mxu0 %v477
    %v545 = vpop.f32.mrb[0].mxu0
    %v546 = vadd.f32 0.0, %v545
    %v547 = vpop.f32.mrb[0].mxu0
    %v548 = vadd.f32 0.0, %v547
    %549 = vdwg.mxu0
    %v550 = vadd.f32 %v215, %v546
    %v551 = vadd.f32 %v217, %v548
    %v552 = vxor.u32 %v550, 2147483648
    %v553 = vxor.u32 %v551, 2147483648
    %v554 = vmul.f32 %v552, 1.442695
    %v555 = vpow.pop %v554
    %v556 = vmul.f32 %v553, 1.442695
    %v557 = vpow.pop %v556
    %v558 = vadd.f32 %v555, 1.0
    %v559 = vadd.f32 %v557, 1.0
    %v560 = vrcp.pop %v558
    %v561 = vmul.f32 1.0, %v560
    %v562 = vrcp.pop %v559
    %v563 = vmul.f32 1.0, %v562
    %v564 = vmul.f32 %v563, 2.0
    %v565 = vsub.f32 %v564, 1.0
    %567 = vrot.lane.b32.xlu0 %v473, 32
    %v568 = vpop.permute.xlu0 %567
    %v570 = vmul.f32 %v561, %v568
    %v571 = vmul.f32 %v561, %v565
    %573 = vrot.lane.b32.xlu0 %v571, 64
    %v574 = vpop.permute.xlu0 %573
    %v576 = vadd.f32 %v570, %v574
    %v577 = vtanh.pop %v576
    %v578 = vmul.f32 %v563, %v577
    %580 = vrot.lane.b32.xlu0 %v578, 96
    %v581 = vpop.permute.xlu0 %580
    %v583 = vsel %vm94, %v581, %v468
    %585 = vrot.lane.b32.xlu0 %v576, 96
    %v586 = vpop.permute.xlu0 %585
    %v588 = vsel %vm94, %v586, %v473
    %590 = vrot.lane.b32.xlu0 %v583, 96
    %v591 = vpop.permute.xlu0 %590
    %v592 = vsel %vm249, %v591, 0
    %594 = vmatprep.subr.mxu0 %v48
    %595 = vmatpush1.msra.mxu0 %v47
    %596 = vmatprep.subr.mxu0 %v50
    %597 = vmatpush1.msra.mxu0 %v49
    %598 = vmatprep.subr.mxu0 %v52
    %599 = vmatpush1.msra.mxu0 %v51
    %600 = vmatprep.subr.mxu0 %v54
    %601 = vmatpush1.msra.mxu0 %v53
    %602 = vmatprep.subr.mxu0 %v56
    %603 = vmatpush1.msra.mxu0 %v55
    %604 = vmatprep.subr.mxu0 %v58
    %605 = vmatpush1.msra.mxu0 %v57
    %606 = vmatprep.subr.mxu0 %v60
    %607 = vmatpush1.msra.mxu0 %v59
    %608 = vmatprep.subr.mxu0 %v62
    %609 = vmatpush1.msra.mxu0 %v61
    %610 = vmatprep.subr.mxu0 0.0
    %611 = vmatpush1.msra.mxu0 0.0
    %612 = vmatprep.subr.mxu0 0.0
    %613 = vmatpush1.msra.mxu0 0.0
    %614 = vmatprep.subr.mxu0 0.0
    %615 = vmatpush1.msra.mxu0 0.0
    %616 = vmatprep.subr.mxu0 0.0
    %617 = vmatpush1.msra.mxu0 0.0
    %618 = vmatprep.subr.mxu0 0.0
    %619 = vmatpush1.msra.mxu0 0.0
    %620 = vmatprep.subr.mxu0 0.0
    %621 = vmatpush1.msra.mxu0 0.0
    %622 = vmatprep.subr.mxu0 0.0
    %623 = vmatpush1.msra.mxu0 0.0
    %624 = vmatprep.subr.mxu0 0.0
    %625 = vmatpush1.msra.mxu0 0.0
    %626 = vmatprep.subr.mxu0 0.0
    %627 = vmatpush1.msra.mxu0 0.0
    %628 = vmatprep.subr.mxu0 0.0
    %629 = vmatpush1.msra.mxu0 0.0
    %630 = vmatprep.subr.mxu0 0.0
    %631 = vmatpush1.msra.mxu0 0.0
    %632 = vmatprep.subr.mxu0 0.0
    %633 = vmatpush1.msra.mxu0 0.0
    %634 = vmatprep.subr.mxu0 0.0
    %635 = vmatpush1.msra.mxu0 0.0
    %636 = vmatprep.subr.mxu0 0.0
    %637 = vmatpush1.msra.mxu0 0.0
    %638 = vmatprep.subr.mxu0 0.0
    %639 = vmatpush1.msra.mxu0 0.0
    %640 = vmatprep.subr.mxu0 0.0
    %641 = vmatpush1.msra.mxu0 0.0
    %642 = vmatprep.subr.mxu0 0.0
    %643 = vmatpush1.msra.mxu0 0.0
    %644 = vmatprep.subr.mxu0 0.0
    %645 = vmatpush1.msra.mxu0 0.0
    %646 = vmatprep.subr.mxu0 0.0
    %647 = vmatpush1.msra.mxu0 0.0
    %648 = vmatprep.subr.mxu0 0.0
    %649 = vmatpush1.msra.mxu0 0.0
    %650 = vmatprep.subr.mxu0 0.0
    %651 = vmatpush1.msra.mxu0 0.0
    %652 = vmatprep.subr.mxu0 0.0
    %653 = vmatpush1.msra.mxu0 0.0
    %654 = vmatprep.subr.mxu0 0.0
    %655 = vmatpush1.msra.mxu0 0.0
    %656 = vmatprep.subr.mxu0 0.0
    %657 = vmatpush1.msra.mxu0 0.0
    %658 = vmatprep.mubr.f32.mxu0 0.0
    %659 = vmatmul.mubr.f32.gmra.mrb[0].mxu0 %v592
    %v660 = vpop.f32.mrb[0].mxu0
    %v661 = vadd.f32 0.0, %v660
    %v662 = vpop.f32.mrb[0].mxu0
    %v663 = vadd.f32 0.0, %v662
    %664 = vdwg.mxu0
    %v665 = vadd.f32 %v221, %v661
    %v666 = vadd.f32 %v223, %v663
    %v667 = vxor.u32 %v665, 2147483648
    %v668 = vxor.u32 %v666, 2147483648
    %v669 = vmul.f32 %v667, 1.442695
    %v670 = vpow.pop %v669
    %v671 = vmul.f32 %v668, 1.442695
    %v672 = vpow.pop %v671
    %v673 = vadd.f32 %v670, 1.0
    %v674 = vadd.f32 %v672, 1.0
    %v675 = vrcp.pop %v673
    %v676 = vmul.f32 1.0, %v675
    %v677 = vrcp.pop %v674
    %v678 = vmul.f32 1.0, %v677
    %v679 = vmul.f32 %v678, 2.0
    %v680 = vsub.f32 %v679, 1.0
    %682 = vrot.lane.b32.xlu0 %v588, 32
    %v683 = vpop.permute.xlu0 %682
    %v685 = vmul.f32 %v676, %v683
    %v686 = vmul.f32 %v676, %v680
    %688 = vrot.lane.b32.xlu0 %v686, 64
    %v689 = vpop.permute.xlu0 %688
    %v691 = vadd.f32 %v685, %v689
    %v692 = vtanh.pop %v691
    %v693 = vmul.f32 %v678, %v692
    %695 = vrot.lane.b32.xlu0 %v693, 96
    %v696 = vpop.permute.xlu0 %695
    %v698 = vsel %vm95, %v696, %v583
    %700 = vrot.lane.b32.xlu0 %v691, 96
    %v701 = vpop.permute.xlu0 %700
    %v703 = vsel %vm95, %v701, %v588
    %705 = vrot.lane.b32.xlu0 %v698, 96
    %v706 = vpop.permute.xlu0 %705
    %v707 = vsel %vm249, %v706, 0
    %709 = vmatprep.subr.mxu0 %v48
    %710 = vmatpush1.msra.mxu0 %v47
    %711 = vmatprep.subr.mxu0 %v50
    %712 = vmatpush1.msra.mxu0 %v49
    %713 = vmatprep.subr.mxu0 %v52
    %714 = vmatpush1.msra.mxu0 %v51
    %715 = vmatprep.subr.mxu0 %v54
    %716 = vmatpush1.msra.mxu0 %v53
    %717 = vmatprep.subr.mxu0 %v56
    %718 = vmatpush1.msra.mxu0 %v55
    %719 = vmatprep.subr.mxu0 %v58
    %720 = vmatpush1.msra.mxu0 %v57
    %721 = vmatprep.subr.mxu0 %v60
    %722 = vmatpush1.msra.mxu0 %v59
    %723 = vmatprep.subr.mxu0 %v62
    %724 = vmatpush1.msra.mxu0 %v61
    %725 = vmatprep.subr.mxu0 0.0
    %726 = vmatpush1.msra.mxu0 0.0
    %727 = vmatprep.subr.mxu0 0.0
    %728 = vmatpush1.msra.mxu0 0.0
    %729 = vmatprep.subr.mxu0 0.0
    %730 = vmatpush1.msra.mxu0 0.0
    %731 = vmatprep.subr.mxu0 0.0
    %732 = vmatpush1.msra.mxu0 0.0
    %733 = vmatprep.subr.mxu0 0.0
    %734 = vmatpush1.msra.mxu0 0.0
    %735 = vmatprep.subr.mxu0 0.0
    %736 = vmatpush1.msra.mxu0 0.0
    %737 = vmatprep.subr.mxu0 0.0
    %738 = vmatpush1.msra.mxu0 0.0
    %739 = vmatprep.subr.mxu0 0.0
    %740 = vmatpush1.msra.mxu0 0.0
    %741 = vmatprep.subr.mxu0 0.0
    %742 = vmatpush1.msra.mxu0 0.0
    %743 = vmatprep.subr.mxu0 0.0
    %744 = vmatpush1.msra.mxu0 0.0
    %745 = vmatprep.subr.mxu0 0.0
    %746 = vmatpush1.msra.mxu0 0.0
    %747 = vmatprep.subr.mxu0 0.0
    %748 = vmatpush1.msra.mxu0 0.0
    %749 = vmatprep.subr.mxu0 0.0
    %750 = vmatpush1.msra.mxu0 0.0
    %751 = vmatprep.subr.mxu0 0.0
    %752 = vmatpush1.msra.mxu0 0.0
    %753 = vmatprep.subr.mxu0 0.0
    %754 = vmatpush1.msra.mxu0 0.0
    %755 = vmatprep.subr.mxu0 0.0
    %756 = vmatpush1.msra.mxu0 0.0
    %757 = vmatprep.subr.mxu0 0.0
    %758 = vmatpush1.msra.mxu0 0.0
    %759 = vmatprep.subr.mxu0 0.0
    %760 = vmatpush1.msra.mxu0 0.0
    %761 = vmatprep.subr.mxu0 0.0
    %762 = vmatpush1.msra.mxu0 0.0
    %763 = vmatprep.subr.mxu0 0.0
    %764 = vmatpush1.msra.mxu0 0.0
    %765 = vmatprep.subr.mxu0 0.0
    %766 = vmatpush1.msra.mxu0 0.0
    %767 = vmatprep.subr.mxu0 0.0
    %768 = vmatpush1.msra.mxu0 0.0
    %769 = vmatprep.subr.mxu0 0.0
    %770 = vmatpush1.msra.mxu0 0.0
    %771 = vmatprep.subr.mxu0 0.0
    %772 = vmatpush1.msra.mxu0 0.0
    %773 = vmatprep.mubr.f32.mxu0 0.0
    %774 = vmatmul.mubr.f32.gmra.mrb[0].mxu0 %v707
    %v775 = vpop.f32.mrb[0].mxu0
    %v776 = vadd.f32 0.0, %v775
    %v777 = vpop.f32.mrb[0].mxu0
    %v778 = vadd.f32 0.0, %v777
    %779 = vdwg.mxu0
    %v780 = vadd.f32 %v227, %v776
    %v781 = vadd.f32 %v229, %v778
    %v782 = vxor.u32 %v780, 2147483648
    %v783 = vxor.u32 %v781, 2147483648
    %v784 = vmul.f32 %v782, 1.442695
    %v785 = vpow.pop %v784
    %v786 = vmul.f32 %v783, 1.442695
    %v787 = vpow.pop %v786
    %v788 = vadd.f32 %v785, 1.0
    %v789 = vadd.f32 %v787, 1.0
    %v790 = vrcp.pop %v788
    %v791 = vmul.f32 1.0, %v790
    %v792 = vrcp.pop %v789
    %v793 = vmul.f32 1.0, %v792
    %v794 = vmul.f32 %v793, 2.0
    %v795 = vsub.f32 %v794, 1.0
    %797 = vrot.lane.b32.xlu0 %v703, 32
    %v798 = vpop.permute.xlu0 %797
    %v800 = vmul.f32 %v791, %v798
    %v801 = vmul.f32 %v791, %v795
    %803 = vrot.lane.b32.xlu0 %v801, 64
    %v804 = vpop.permute.xlu0 %803
    %v806 = vadd.f32 %v800, %v804
    %v807 = vtanh.pop %v806
    %v808 = vmul.f32 %v793, %v807
    %810 = vrot.lane.b32.xlu0 %v808, 96
    %v811 = vpop.permute.xlu0 %810
    %v813 = vsel %vm96, %v811, %v698
    %815 = vrot.lane.b32.xlu0 %v806, 96
    %v816 = vpop.permute.xlu0 %815
    %v818 = vsel %vm96, %v816, %v703
    %820 = vrot.lane.b32.xlu0 %v813, 96
    %v821 = vpop.permute.xlu0 %820
    %v822 = vsel %vm249, %v821, 0
    %824 = vmatprep.subr.mxu0 %v48
    %825 = vmatpush1.msra.mxu0 %v47
    %826 = vmatprep.subr.mxu0 %v50
    %827 = vmatpush1.msra.mxu0 %v49
    %828 = vmatprep.subr.mxu0 %v52
    %829 = vmatpush1.msra.mxu0 %v51
    %830 = vmatprep.subr.mxu0 %v54
    %831 = vmatpush1.msra.mxu0 %v53
    %832 = vmatprep.subr.mxu0 %v56
    %833 = vmatpush1.msra.mxu0 %v55
    %834 = vmatprep.subr.mxu0 %v58
    %835 = vmatpush1.msra.mxu0 %v57
    %836 = vmatprep.subr.mxu0 %v60
    %837 = vmatpush1.msra.mxu0 %v59
    %838 = vmatprep.subr.mxu0 %v62
    %839 = vmatpush1.msra.mxu0 %v61
    %840 = vmatprep.subr.mxu0 0.0
    %841 = vmatpush1.msra.mxu0 0.0
    %842 = vmatprep.subr.mxu0 0.0
    %843 = vmatpush1.msra.mxu0 0.0
    %844 = vmatprep.subr.mxu0 0.0
    %845 = vmatpush1.msra.mxu0 0.0
    %846 = vmatprep.subr.mxu0 0.0
    %847 = vmatpush1.msra.mxu0 0.0
    %848 = vmatprep.subr.mxu0 0.0
    %849 = vmatpush1.msra.mxu0 0.0
    %850 = vmatprep.subr.mxu0 0.0
    %851 = vmatpush1.msra.mxu0 0.0
    %852 = vmatprep.subr.mxu0 0.0
    %853 = vmatpush1.msra.mxu0 0.0
    %854 = vmatprep.subr.mxu0 0.0
    %855 = vmatpush1.msra.mxu0 0.0
    %856 = vmatprep.subr.mxu0 0.0
    %857 = vmatpush1.msra.mxu0 0.0
    %858 = vmatprep.subr.mxu0 0.0
    %859 = vmatpush1.msra.mxu0 0.0
    %860 = vmatprep.subr.mxu0 0.0
    %861 = vmatpush1.msra.mxu0 0.0
    %862 = vmatprep.subr.mxu0 0.0
    %863 = vmatpush1.msra.mxu0 0.0
    %864 = vmatprep.subr.mxu0 0.0
    %865 = vmatpush1.msra.mxu0 0.0
    %866 = vmatprep.subr.mxu0 0.0
    %867 = vmatpush1.msra.mxu0 0.0
    %868 = vmatprep.subr.mxu0 0.0
    %869 = vmatpush1.msra.mxu0 0.0
    %870 = vmatprep.subr.mxu0 0.0
    %871 = vmatpush1.msra.mxu0 0.0
    %872 = vmatprep.subr.mxu0 0.0
    %873 = vmatpush1.msra.mxu0 0.0
    %874 = vmatprep.subr.mxu0 0.0
    %875 = vmatpush1.msra.mxu0 0.0
    %876 = vmatprep.subr.mxu0 0.0
    %877 = vmatpush1.msra.mxu0 0.0
    %878 = vmatprep.subr.mxu0 0.0
    %879 = vmatpush1.msra.mxu0 0.0
    %880 = vmatprep.subr.mxu0 0.0
    %881 = vmatpush1.msra.mxu0 0.0
    %882 = vmatprep.subr.mxu0 0.0
    %883 = vmatpush1.msra.mxu0 0.0
    %884 = vmatprep.subr.mxu0 0.0
    %885 = vmatpush1.msra.mxu0 0.0
    %886 = vmatprep.subr.mxu0 0.0
    %887 = vmatpush1.msra.mxu0 0.0
    %888 = vmatprep.mubr.f32.mxu0 0.0
    %889 = vmatmul.mubr.f32.gmra.mrb[0].mxu0 %v822
    %v890 = vpop.f32.mrb[0].mxu0
    %v891 = vadd.f32 0.0, %v890
    %v892 = vpop.f32.mrb[0].mxu0
    %v893 = vadd.f32 0.0, %v892
    %894 = vdwg.mxu0
    %v895 = vadd.f32 %v233, %v891
    %v896 = vadd.f32 %v235, %v893
    %v897 = vxor.u32 %v895, 2147483648
    %v898 = vxor.u32 %v896, 2147483648
    %v899 = vmul.f32 %v897, 1.442695
    %v900 = vpow.pop %v899
    %v901 = vmul.f32 %v898, 1.442695
    %v902 = vpow.pop %v901
    %v903 = vadd.f32 %v900, 1.0
    %v904 = vadd.f32 %v902, 1.0
    %v905 = vrcp.pop %v903
    %v906 = vmul.f32 1.0, %v905
    %v907 = vrcp.pop %v904
    %v908 = vmul.f32 1.0, %v907
    %v909 = vmul.f32 %v908, 2.0
    %v910 = vsub.f32 %v909, 1.0
    %912 = vrot.lane.b32.xlu0 %v818, 32
    %v913 = vpop.permute.xlu0 %912
    %v915 = vmul.f32 %v906, %v913
    %v916 = vmul.f32 %v906, %v910
    %918 = vrot.lane.b32.xlu0 %v916, 64
    %v919 = vpop.permute.xlu0 %918
    %v921 = vadd.f32 %v915, %v919
    %v922 = vtanh.pop %v921
    %v923 = vmul.f32 %v908, %v922
    %925 = vrot.lane.b32.xlu0 %v923, 96
    %v926 = vpop.permute.xlu0 %925
    %v928 = vsel %vm97, %v926, %v813
    %930 = vrot.lane.b32.xlu0 %v921, 96
    %v931 = vpop.permute.xlu0 %930
    %v933 = vsel %vm97, %v931, %v818
    %935 = vrot.lane.b32.xlu0 %v928, 96
    %v936 = vpop.permute.xlu0 %935
    %v937 = vsel %vm249, %v936, 0
    %939 = vmatprep.subr.mxu0 %v48
    %940 = vmatpush1.msra.mxu0 %v47
    %941 = vmatprep.subr.mxu0 %v50
    %942 = vmatpush1.msra.mxu0 %v49
    %943 = vmatprep.subr.mxu0 %v52
    %944 = vmatpush1.msra.mxu0 %v51
    %945 = vmatprep.subr.mxu0 %v54
    %946 = vmatpush1.msra.mxu0 %v53
    %947 = vmatprep.subr.mxu0 %v56
    %948 = vmatpush1.msra.mxu0 %v55
    %949 = vmatprep.subr.mxu0 %v58
    %950 = vmatpush1.msra.mxu0 %v57
    %951 = vmatprep.subr.mxu0 %v60
    %952 = vmatpush1.msra.mxu0 %v59
    %953 = vmatprep.subr.mxu0 %v62
    %954 = vmatpush1.msra.mxu0 %v61
    %955 = vmatprep.subr.mxu0 0.0
    %956 = vmatpush1.msra.mxu0 0.0
    %957 = vmatprep.subr.mxu0 0.0
    %958 = vmatpush1.msra.mxu0 0.0
    %959 = vmatprep.subr.mxu0 0.0
    %960 = vmatpush1.msra.mxu0 0.0
    %961 = vmatprep.subr.mxu0 0.0
    %962 = vmatpush1.msra.mxu0 0.0
    %963 = vmatprep.subr.mxu0 0.0
    %964 = vmatpush1.msra.mxu0 0.0
    %965 = vmatprep.subr.mxu0 0.0
    %966 = vmatpush1.msra.mxu0 0.0
    %967 = vmatprep.subr.mxu0 0.0
    %968 = vmatpush1.msra.mxu0 0.0
    %969 = vmatprep.subr.mxu0 0.0
    %970 = vmatpush1.msra.mxu0 0.0
    %971 = vmatprep.subr.mxu0 0.0
    %972 = vmatpush1.msra.mxu0 0.0
    %973 = vmatprep.subr.mxu0 0.0
    %974 = vmatpush1.msra.mxu0 0.0
    %975 = vmatprep.subr.mxu0 0.0
    %976 = vmatpush1.msra.mxu0 0.0
    %977 = vmatprep.subr.mxu0 0.0
    %978 = vmatpush1.msra.mxu0 0.0
    %979 = vmatprep.subr.mxu0 0.0
    %980 = vmatpush1.msra.mxu0 0.0
    %981 = vmatprep.subr.mxu0 0.0
    %982 = vmatpush1.msra.mxu0 0.0
    %983 = vmatprep.subr.mxu0 0.0
    %984 = vmatpush1.msra.mxu0 0.0
    %985 = vmatprep.subr.mxu0 0.0
    %986 = vmatpush1.msra.mxu0 0.0
    %987 = vmatprep.subr.mxu0 0.0
    %988 = vmatpush1.msra.mxu0 0.0
    %989 = vmatprep.subr.mxu0 0.0
    %990 = vmatpush1.msra.mxu0 0.0
    %991 = vmatprep.subr.mxu0 0.0
    %992 = vmatpush1.msra.mxu0 0.0
    %993 = vmatprep.subr.mxu0 0.0
    %994 = vmatpush1.msra.mxu0 0.0
    %995 = vmatprep.subr.mxu0 0.0
    %996 = vmatpush1.msra.mxu0 0.0
    %997 = vmatprep.subr.mxu0 0.0
    %998 = vmatpush1.msra.mxu0 0.0
    %999 = vmatprep.subr.mxu0 0.0
    %1000 = vmatpush1.msra.mxu0 0.0
    %1001 = vmatprep.subr.mxu0 0.0
    %1002 = vmatpush1.msra.mxu0 0.0
    %1003 = vmatprep.mubr.f32.mxu0 0.0
    %1004 = vmatmul.mubr.f32.gmra.mrb[0].mxu0 %v937
    %v1005 = vpop.f32.mrb[0].mxu0
    %v1006 = vadd.f32 0.0, %v1005
    %v1007 = vpop.f32.mrb[0].mxu0
    %v1008 = vadd.f32 0.0, %v1007
    %1009 = vdwg.mxu0
    %v1010 = vadd.f32 %v239, %v1006
    %v1011 = vadd.f32 %v241, %v1008
    %v1012 = vxor.u32 %v1010, 2147483648
    %v1013 = vxor.u32 %v1011, 2147483648
    %v1014 = vmul.f32 %v1012, 1.442695
    %v1015 = vpow.pop %v1014
    %v1016 = vmul.f32 %v1013, 1.442695
    %v1017 = vpow.pop %v1016
    %v1018 = vadd.f32 %v1015, 1.0
    %v1019 = vadd.f32 %v1017, 1.0
    %v1020 = vrcp.pop %v1018
    %v1021 = vmul.f32 1.0, %v1020
    %v1022 = vrcp.pop %v1019
    %v1023 = vmul.f32 1.0, %v1022
    %v1024 = vmul.f32 %v1023, 2.0
    %v1025 = vsub.f32 %v1024, 1.0
    %1027 = vrot.lane.b32.xlu0 %v933, 32
    %v1028 = vpop.permute.xlu0 %1027
    %v1030 = vmul.f32 %v1021, %v1028
    %v1031 = vmul.f32 %v1021, %v1025
    %1033 = vrot.lane.b32.xlu0 %v1031, 64
    %v1034 = vpop.permute.xlu0 %1033
    %v1036 = vadd.f32 %v1030, %v1034
    %v1037 = vtanh.pop %v1036
    %v1038 = vmul.f32 %v1023, %v1037
    %1040 = vrot.lane.b32.xlu0 %v1038, 96
    %v1041 = vpop.permute.xlu0 %1040
    %v1043 = vsel %vm98, %v1041, %v928
    %1045 = vrot.lane.b32.xlu0 %v1036, 96
    %v1046 = vpop.permute.xlu0 %1045
    %v1048 = vsel %vm98, %v1046, %v933
    %1050 = vrot.lane.b32.xlu0 %v1043, 96
    %v1051 = vpop.permute.xlu0 %1050
    %v1052 = vsel %vm249, %v1051, 0
    %1054 = vmatprep.subr.mxu0 %v48
    %1055 = vmatpush1.msra.mxu0 %v47
    %1056 = vmatprep.subr.mxu0 %v50
    %1057 = vmatpush1.msra.mxu0 %v49
    %1058 = vmatprep.subr.mxu0 %v52
    %1059 = vmatpush1.msra.mxu0 %v51
    %1060 = vmatprep.subr.mxu0 %v54
    %1061 = vmatpush1.msra.mxu0 %v53
    %1062 = vmatprep.subr.mxu0 %v56
    %1063 = vmatpush1.msra.mxu0 %v55
    %1064 = vmatprep.subr.mxu0 %v58
    %1065 = vmatpush1.msra.mxu0 %v57
    %1066 = vmatprep.subr.mxu0 %v60
    %1067 = vmatpush1.msra.mxu0 %v59
    %1068 = vmatprep.subr.mxu0 %v62
    %1069 = vmatpush1.msra.mxu0 %v61
    %1070 = vmatprep.subr.mxu0 0.0
    %1071 = vmatpush1.msra.mxu0 0.0
    %1072 = vmatprep.subr.mxu0 0.0
    %1073 = vmatpush1.msra.mxu0 0.0
    %1074 = vmatprep.subr.mxu0 0.0
    %1075 = vmatpush1.msra.mxu0 0.0
    %1076 = vmatprep.subr.mxu0 0.0
    %1077 = vmatpush1.msra.mxu0 0.0
    %1078 = vmatprep.subr.mxu0 0.0
    %1079 = vmatpush1.msra.mxu0 0.0
    %1080 = vmatprep.subr.mxu0 0.0
    %1081 = vmatpush1.msra.mxu0 0.0
    %1082 = vmatprep.subr.mxu0 0.0
    %1083 = vmatpush1.msra.mxu0 0.0
    %1084 = vmatprep.subr.mxu0 0.0
    %1085 = vmatpush1.msra.mxu0 0.0
    %1086 = vmatprep.subr.mxu0 0.0
    %1087 = vmatpush1.msra.mxu0 0.0
    %1088 = vmatprep.subr.mxu0 0.0
    %1089 = vmatpush1.msra.mxu0 0.0
    %1090 = vmatprep.subr.mxu0 0.0
    %1091 = vmatpush1.msra.mxu0 0.0
    %1092 = vmatprep.subr.mxu0 0.0
    %1093 = vmatpush1.msra.mxu0 0.0
    %1094 = vmatprep.subr.mxu0 0.0
    %1095 = vmatpush1.msra.mxu0 0.0
    %1096 = vmatprep.subr.mxu0 0.0
    %1097 = vmatpush1.msra.mxu0 0.0
    %1098 = vmatprep.subr.mxu0 0.0
    %1099 = vmatpush1.msra.mxu0 0.0
    %1100 = vmatprep.subr.mxu0 0.0
    %1101 = vmatpush1.msra.mxu0 0.0
    %1102 = vmatprep.subr.mxu0 0.0
    %1103 = vmatpush1.msra.mxu0 0.0
    %1104 = vmatprep.subr.mxu0 0.0
    %1105 = vmatpush1.msra.mxu0 0.0
    %1106 = vmatprep.subr.mxu0 0.0
    %1107 = vmatpush1.msra.mxu0 0.0
    %1108 = vmatprep.subr.mxu0 0.0
    %1109 = vmatpush1.msra.mxu0 0.0
    %1110 = vmatprep.subr.mxu0 0.0
    %1111 = vmatpush1.msra.mxu0 0.0
    %1112 = vmatprep.subr.mxu0 0.0
    %1113 = vmatpush1.msra.mxu0 0.0
    %1114 = vmatprep.subr.mxu0 0.0
    %1115 = vmatpush1.msra.mxu0 0.0
    %1116 = vmatprep.subr.mxu0 0.0
    %1117 = vmatpush1.msra.mxu0 0.0
    %1118 = vmatprep.mubr.f32.mxu0 0.0
    %1119 = vmatmul.mubr.f32.gmra.mrb[0].mxu0 %v1052
    %v1120 = vpop.f32.mrb[0].mxu0
    %v1121 = vadd.f32 0.0, %v1120
    %v1122 = vpop.f32.mrb[0].mxu0
    %v1123 = vadd.f32 0.0, %v1122
    %1124 = vdwg.mxu0
    %v1125 = vadd.f32 %v245, %v1121
    %v1126 = vadd.f32 %v247, %v1123
    %v1127 = vxor.u32 %v1125, 2147483648
    %v1128 = vxor.u32 %v1126, 2147483648
    %v1129 = vmul.f32 %v1127, 1.442695
    %v1130 = vpow.pop %v1129
    %v1131 = vmul.f32 %v1128, 1.442695
    %v1132 = vpow.pop %v1131
    %v1133 = vadd.f32 %v1130, 1.0
    %v1134 = vadd.f32 %v1132, 1.0
    %v1135 = vrcp.pop %v1133
    %v1136 = vmul.f32 1.0, %v1135
    %v1137 = vrcp.pop %v1134
    %v1138 = vmul.f32 1.0, %v1137
    %v1139 = vmul.f32 %v1138, 2.0
    %v1140 = vsub.f32 %v1139, 1.0
    %1142 = vrot.lane.b32.xlu0 %v1048, 32
    %v1143 = vpop.permute.xlu0 %1142
    %v1145 = vmul.f32 %v1136, %v1143
    %v1146 = vmul.f32 %v1136, %v1140
    %1148 = vrot.lane.b32.xlu0 %v1146, 64
    %v1149 = vpop.permute.xlu0 %1148
    %v1151 = vadd.f32 %v1145, %v1149
    %v1152 = vtanh.pop %v1151
    %v1153 = vmul.f32 %v1138, %v1152
    %1155 = vrot.lane.b32.xlu0 %v1153, 96
    %v1156 = vpop.permute.xlu0 %1155
    %v1158 = vsel %vm99, %v1156, %v1043
    %1161 = vrot.lane.b32.xlu0 %v1158, 96
    %v1162 = vpop.permute.xlu0 %1161
    %v1164 = vsel %vm111, %v361, %v1162
    %v1167 = vsel %vm111, %v476, %v1051
    %v1170 = vsel %vm111, %v591, %v936
    %v1173 = vsel %vm111, %v706, %v821
    %v1174 = vsel %vm111, %v821, %v706
    %v1175 = vsel %vm111, %v936, %v591
    %v1176 = vsel %vm111, %v1051, %v476
    %v1177 = vsel %vm111, %v1162, %v361
    %v1179 = vsel %vm249, %v1164, 0
    %v1182 = vsel %vm249, %v1167, 0
    %v1185 = vsel %vm249, %v1170, 0
    %v1188 = vsel %vm249, %v1173, 0
    %v1191 = vsel %vm249, %v1174, 0
    %v1194 = vsel %vm249, %v1175, 0
    %v1197 = vsel %vm249, %v1176, 0
    %v1200 = vsel %vm249, %v1177, 0
    %1202 = vmatprep.subr.mxu0 0.0
    %1203 = vmatpush1.msra.mxu0 %v65
    %1204 = vmatprep.subr.mxu0 0.0
    %1205 = vmatpush1.msra.mxu0 %v66
    %1206 = vmatprep.subr.mxu0 0.0
    %1207 = vmatpush1.msra.mxu0 %v67
    %1208 = vmatprep.subr.mxu0 0.0
    %1209 = vmatpush1.msra.mxu0 %v68
    %1210 = vmatprep.subr.mxu0 0.0
    %1211 = vmatpush1.msra.mxu0 %v69
    %1212 = vmatprep.subr.mxu0 0.0
    %1213 = vmatpush1.msra.mxu0 %v70
    %1214 = vmatprep.subr.mxu0 0.0
    %1215 = vmatpush1.msra.mxu0 %v71
    %1216 = vmatprep.subr.mxu0 0.0
    %1217 = vmatpush1.msra.mxu0 %v72
    %1218 = vmatprep.subr.mxu0 0.0
    %1219 = vmatpush1.msra.mxu0 0.0
    %1220 = vmatprep.subr.mxu0 0.0
    %1221 = vmatpush1.msra.mxu0 0.0
    %1222 = vmatprep.subr.mxu0 0.0
    %1223 = vmatpush1.msra.mxu0 0.0
    %1224 = vmatprep.subr.mxu0 0.0
    %1225 = vmatpush1.msra.mxu0 0.0
    %1226 = vmatprep.subr.mxu0 0.0
    %1227 = vmatpush1.msra.mxu0 0.0
    %1228 = vmatprep.subr.mxu0 0.0
    %1229 = vmatpush1.msra.mxu0 0.0
    %1230 = vmatprep.subr.mxu0 0.0
    %1231 = vmatpush1.msra.mxu0 0.0
    %1232 = vmatprep.subr.mxu0 0.0
    %1233 = vmatpush1.msra.mxu0 0.0
    %1234 = vmatprep.subr.mxu0 0.0
    %1235 = vmatpush1.msra.mxu0 0.0
    %1236 = vmatprep.subr.mxu0 0.0
    %1237 = vmatpush1.msra.mxu0 0.0
    %1238 = vmatprep.subr.mxu0 0.0
    %1239 = vmatpush1.msra.mxu0 0.0
    %1240 = vmatprep.subr.mxu0 0.0
    %1241 = vmatpush1.msra.mxu0 0.0
    %1242 = vmatprep.subr.mxu0 0.0
    %1243 = vmatpush1.msra.mxu0 0.0
    %1244 = vmatprep.subr.mxu0 0.0
    %1245 = vmatpush1.msra.mxu0 0.0
    %1246 = vmatprep.subr.mxu0 0.0
    %1247 = vmatpush1.msra.mxu0 0.0
    %1248 = vmatprep.subr.mxu0 0.0
    %1249 = vmatpush1.msra.mxu0 0.0
    %1250 = vmatprep.subr.mxu0 0.0
    %1251 = vmatpush1.msra.mxu0 0.0
    %1252 = vmatprep.subr.mxu0 0.0
    %1253 = vmatpush1.msra.mxu0 0.0
    %1254 = vmatprep.subr.mxu0 0.0
    %1255 = vmatpush1.msra.mxu0 0.0
    %1256 = vmatprep.subr.mxu0 0.0
    %1257 = vmatpush1.msra.mxu0 0.0
    %1258 = vmatprep.subr.mxu0 0.0
    %1259 = vmatpush1.msra.mxu0 0.0
    %1260 = vmatprep.subr.mxu0 0.0
    %1261 = vmatpush1.msra.mxu0 0.0
    %1262 = vmatprep.subr.mxu0 0.0
    %1263 = vmatpush1.msra.mxu0 0.0
    %1264 = vmatprep.subr.mxu0 0.0
    %1265 = vmatpush1.msra.mxu0 0.0
    %1266 = vmatprep.mubr.f32.mxu0 0.0
    %1267 = vmatmul.mubr.f32.gmra.mrb[0].mxu0 %v1179
    %v1268 = vpop.f32.mrb[0].mxu0
    %v1269 = vadd.f32 %v77, %v1268
    %v1270 = vpop.f32.mrb[0].mxu0
    %1271 = vmatprep.mubr.f32.mxu0 0.0
    %1272 = vmatmul.mubr.f32.gmra.mrb[0].mxu0 %v1182
    %v1273 = vpop.f32.mrb[0].mxu0
    %v1274 = vadd.f32 %v77, %v1273
    %v1275 = vpop.f32.mrb[0].mxu0
    %1276 = vmatprep.mubr.f32.mxu0 0.0
    %1277 = vmatmul.mubr.f32.gmra.mrb[0].mxu0 %v1185
    %v1278 = vpop.f32.mrb[0].mxu0
    %v1279 = vadd.f32 %v77, %v1278
    %v1280 = vpop.f32.mrb[0].mxu0
    %1281 = vmatprep.mubr.f32.mxu0 0.0
    %1282 = vmatmul.mubr.f32.gmra.mrb[0].mxu0 %v1188
    %v1283 = vpop.f32.mrb[0].mxu0
    %v1284 = vadd.f32 %v77, %v1283
    %v1285 = vpop.f32.mrb[0].mxu0
    %1286 = vmatprep.mubr.f32.mxu0 0.0
    %1287 = vmatmul.mubr.f32.gmra.mrb[0].mxu0 %v1191
    %v1288 = vpop.f32.mrb[0].mxu0
    %v1289 = vadd.f32 %v77, %v1288
    %v1290 = vpop.f32.mrb[0].mxu0
    %1291 = vmatprep.mubr.f32.mxu0 0.0
    %1292 = vmatmul.mubr.f32.gmra.mrb[0].mxu0 %v1194
    %v1293 = vpop.f32.mrb[0].mxu0
    %v1294 = vadd.f32 %v77, %v1293
    %v1295 = vpop.f32.mrb[0].mxu0
    %1296 = vmatprep.mubr.f32.mxu0 0.0
    %1297 = vmatmul.mubr.f32.gmra.mrb[0].mxu0 %v1197
    %v1298 = vpop.f32.mrb[0].mxu0
    %v1299 = vadd.f32 %v77, %v1298
    %v1300 = vpop.f32.mrb[0].mxu0
    %1301 = vmatprep.mubr.f32.mxu0 0.0
    %1302 = vmatmul.mubr.f32.gmra.mrb[0].mxu0 %v1200
    %v1303 = vpop.f32.mrb[0].mxu0
    %v1304 = vadd.f32 %v77, %v1303
    %v1305 = vpop.f32.mrb[0].mxu0
    %1306 = vdwg.mxu0
    %v1307 = vsel %vm111, 0.0, 0
    %1309 = vmatprep.subr.mxu0 0.0
    %1310 = vmatpush1.msra.mxu0 %v73
    %1311 = vmatprep.subr.mxu0 0.0
    %1312 = vmatpush1.msra.mxu0 %v74
    %1313 = vmatprep.subr.mxu0 0.0
    %1314 = vmatpush1.msra.mxu0 %v75
    %1315 = vmatprep.subr.mxu0 0.0
    %1316 = vmatpush1.msra.mxu0 %v76
    %1317 = vmatprep.subr.mxu0 0.0
    %1318 = vmatpush1.msra.mxu0 0.0
    %1319 = vmatprep.subr.mxu0 0.0
    %1320 = vmatpush1.msra.mxu0 0.0
    %1321 = vmatprep.subr.mxu0 0.0
    %1322 = vmatpush1.msra.mxu0 0.0
    %1323 = vmatprep.subr.mxu0 0.0
    %1324 = vmatpush1.msra.mxu0 0.0
    %1325 = vmatprep.subr.mxu0 0.0
    %1326 = vmatpush1.msra.mxu0 0.0
    %1327 = vmatprep.subr.mxu0 0.0
    %1328 = vmatpush1.msra.mxu0 0.0
    %1329 = vmatprep.subr.mxu0 0.0
    %1330 = vmatpush1.msra.mxu0 0.0
    %1331 = vmatprep.subr.mxu0 0.0
    %1332 = vmatpush1.msra.mxu0 0.0
    %1333 = vmatprep.subr.mxu0 0.0
    %1334 = vmatpush1.msra.mxu0 0.0
    %1335 = vmatprep.subr.mxu0 0.0
    %1336 = vmatpush1.msra.mxu0 0.0
    %1337 = vmatprep.subr.mxu0 0.0
    %1338 = vmatpush1.msra.mxu0 0.0
    %1339 = vmatprep.subr.mxu0 0.0
    %1340 = vmatpush1.msra.mxu0 0.0
    %1341 = vmatprep.subr.mxu0 0.0
    %1342 = vmatpush1.msra.mxu0 0.0
    %1343 = vmatprep.subr.mxu0 0.0
    %1344 = vmatpush1.msra.mxu0 0.0
    %1345 = vmatprep.subr.mxu0 0.0
    %1346 = vmatpush1.msra.mxu0 0.0
    %1347 = vmatprep.subr.mxu0 0.0
    %1348 = vmatpush1.msra.mxu0 0.0
    %1349 = vmatprep.subr.mxu0 0.0
    %1350 = vmatpush1.msra.mxu0 0.0
    %1351 = vmatprep.subr.mxu0 0.0
    %1352 = vmatpush1.msra.mxu0 0.0
    %1353 = vmatprep.subr.mxu0 0.0
    %1354 = vmatpush1.msra.mxu0 0.0
    %1355 = vmatprep.subr.mxu0 0.0
    %1356 = vmatpush1.msra.mxu0 0.0
    %1357 = vmatprep.subr.mxu0 0.0
    %1358 = vmatpush1.msra.mxu0 0.0
    %1359 = vmatprep.subr.mxu0 0.0
    %1360 = vmatpush1.msra.mxu0 0.0
    %1361 = vmatprep.subr.mxu0 0.0
    %1362 = vmatpush1.msra.mxu0 0.0
    %1363 = vmatprep.subr.mxu0 0.0
    %1364 = vmatpush1.msra.mxu0 0.0
    %1365 = vmatprep.subr.mxu0 0.0
    %1366 = vmatpush1.msra.mxu0 0.0
    %1367 = vmatprep.subr.mxu0 0.0
    %1368 = vmatpush1.msra.mxu0 0.0
    %1369 = vmatprep.subr.mxu0 0.0
    %1370 = vmatpush1.msra.mxu0 0.0
    %1371 = vmatprep.subr.mxu0 0.0
    %1372 = vmatpush1.msra.mxu0 0.0
    %1373 = vmatprep.mubr.f32.mxu0 0.0
    %1374 = vmatmul.mubr.f32.gmra.mrb[0].mxu0 %v1307
    %v1375 = vpop.f32.mrb[0].mxu0
    %v1376 = vadd.f32 0.0, %v1375
    %v1377 = vpop.f32.mrb[0].mxu0
    %1378 = vdwg.mxu0
    %v1379 = vadd.f32 %v1304, %v1376
    %v1380 = vxor.u32 %v1379, 2147483648
    %v1381 = vmul.f32 %v1380, 1.442695
    %v1382 = vpow.pop %v1381
    %v1383 = vadd.f32 %v1382, 1.0
    %v1384 = vrcp.pop %v1383
    %v1385 = vmul.f32 1.0, %v1384
    %v1386 = vmul.f32 %v1385, 2.0
    %v1387 = vsub.f32 %v1386, 1.0
    %v1388 = vmul.f32 %v1385, 0.0
    %1390 = vrot.lane.b32.xlu0 %v1387, 64
    %v1391 = vpop.permute.xlu0 %1390
    %v1393 = vmul.f32 %v1385, %v1391
    %1395 = vrot.lane.b32.xlu0 %v1393, 32
    %v1396 = vpop.permute.xlu0 %1395
    %v1398 = vadd.f32 %v1388, %v1396
    %v1399 = vtanh.pop %v1398
    %1401 = vrot.lane.b32.xlu0 %v1399, 64
    %v1402 = vpop.permute.xlu0 %1401
    %v1404 = vmul.f32 %v1385, %v1402
    %1406 = vrot.lane.b32.xlu0 %v1404, 64
    %v1407 = vpop.permute.xlu0 %1406
    %v1409 = vsel %vm99, %v1407, 0.0
    %v1410 = vsel %vm99, %v1398, 0.0
    %1412 = vrot.lane.b32.xlu0 %v1409, 96
    %v1413 = vpop.permute.xlu0 %1412
    %v1414 = vsel %vm111, %v1413, 0
    %1416 = vmatprep.subr.mxu0 0.0
    %1417 = vmatpush1.msra.mxu0 %v73
    %1418 = vmatprep.subr.mxu0 0.0
    %1419 = vmatpush1.msra.mxu0 %v74
    %1420 = vmatprep.subr.mxu0 0.0
    %1421 = vmatpush1.msra.mxu0 %v75
    %1422 = vmatprep.subr.mxu0 0.0
    %1423 = vmatpush1.msra.mxu0 %v76
    %1424 = vmatprep.subr.mxu0 0.0
    %1425 = vmatpush1.msra.mxu0 0.0
    %1426 = vmatprep.subr.mxu0 0.0
    %1427 = vmatpush1.msra.mxu0 0.0
    %1428 = vmatprep.subr.mxu0 0.0
    %1429 = vmatpush1.msra.mxu0 0.0
    %1430 = vmatprep.subr.mxu0 0.0
    %1431 = vmatpush1.msra.mxu0 0.0
    %1432 = vmatprep.subr.mxu0 0.0
    %1433 = vmatpush1.msra.mxu0 0.0
    %1434 = vmatprep.subr.mxu0 0.0
    %1435 = vmatpush1.msra.mxu0 0.0
    %1436 = vmatprep.subr.mxu0 0.0
    %1437 = vmatpush1.msra.mxu0 0.0
    %1438 = vmatprep.subr.mxu0 0.0
    %1439 = vmatpush1.msra.mxu0 0.0
    %1440 = vmatprep.subr.mxu0 0.0
    %1441 = vmatpush1.msra.mxu0 0.0
    %1442 = vmatprep.subr.mxu0 0.0
    %1443 = vmatpush1.msra.mxu0 0.0
    %1444 = vmatprep.subr.mxu0 0.0
    %1445 = vmatpush1.msra.mxu0 0.0
    %1446 = vmatprep.subr.mxu0 0.0
    %1447 = vmatpush1.msra.mxu0 0.0
    %1448 = vmatprep.subr.mxu0 0.0
    %1449 = vmatpush1.msra.mxu0 0.0
    %1450 = vmatprep.subr.mxu0 0.0
    %1451 = vmatpush1.msra.mxu0 0.0
    %1452 = vmatprep.subr.mxu0 0.0
    %1453 = vmatpush1.msra.mxu0 0.0
    %1454 = vmatprep.subr.mxu0 0.0
    %1455 = vmatpush1.msra.mxu0 0.0
    %1456 = vmatprep.subr.mxu0 0.0
    %1457 = vmatpush1.msra.mxu0 0.0
    %1458 = vmatprep.subr.mxu0 0.0
    %1459 = vmatpush1.msra.mxu0 0.0
    %1460 = vmatprep.subr.mxu0 0.0
    %1461 = vmatpush1.msra.mxu0 0.0
    %1462 = vmatprep.subr.mxu0 0.0
    %1463 = vmatpush1.msra.mxu0 0.0
    %1464 = vmatprep.subr.mxu0 0.0
    %1465 = vmatpush1.msra.mxu0 0.0
    %1466 = vmatprep.subr.mxu0 0.0
    %1467 = vmatpush1.msra.mxu0 0.0
    %1468 = vmatprep.subr.mxu0 0.0
    %1469 = vmatpush1.msra.mxu0 0.0
    %1470 = vmatprep.subr.mxu0 0.0
    %1471 = vmatpush1.msra.mxu0 0.0
    %1472 = vmatprep.subr.mxu0 0.0
    %1473 = vmatpush1.msra.mxu0 0.0
    %1474 = vmatprep.subr.mxu0 0.0
    %1475 = vmatpush1.msra.mxu0 0.0
    %1476 = vmatprep.subr.mxu0 0.0
    %1477 = vmatpush1.msra.mxu0 0.0
    %1478 = vmatprep.subr.mxu0 0.0
    %1479 = vmatpush1.msra.mxu0 0.0
    %1480 = vmatprep.mubr.f32.mxu0 0.0
    %1481 = vmatmul.mubr.f32.gmra.mrb[0].mxu0 %v1414
    %v1482 = vpop.f32.mrb[0].mxu0
    %v1483 = vadd.f32 0.0, %v1482
    %v1484 = vpop.f32.mrb[0].mxu0
    %1485 = vdwg.mxu0
    %v1486 = vadd.f32 %v1299, %v1483
    %v1487 = vxor.u32 %v1486, 2147483648
    %v1488 = vmul.f32 %v1487, 1.442695
    %v1489 = vpow.pop %v1488
    %v1490 = vadd.f32 %v1489, 1.0
    %v1491 = vrcp.pop %v1490
    %v1492 = vmul.f32 1.0, %v1491
    %v1493 = vmul.f32 %v1492, 2.0
    %v1494 = vsub.f32 %v1493, 1.0
    %v1495 = vmul.f32 %v1492, %v1410
    %1497 = vrot.lane.b32.xlu0 %v1494, 64
    %v1498 = vpop.permute.xlu0 %1497
    %v1500 = vmul.f32 %v1492, %v1498
    %1502 = vrot.lane.b32.xlu0 %v1500, 32
    %v1503 = vpop.permute.xlu0 %1502
    %v1505 = vadd.f32 %v1495, %v1503
    %v1506 = vtanh.pop %v1505
    %1508 = vrot.lane.b32.xlu0 %v1506, 64
    %v1509 = vpop.permute.xlu0 %1508
    %v1511 = vmul.f32 %v1492, %v1509
    %1513 = vrot.lane.b32.xlu0 %v1511, 64
    %v1514 = vpop.permute.xlu0 %1513
    %v1516 = vsel %vm98, %v1514, %v1409
    %v1517 = vsel %vm98, %v1505, %v1410
    %1519 = vrot.lane.b32.xlu0 %v1516, 96
    %v1520 = vpop.permute.xlu0 %1519
    %v1521 = vsel %vm111, %v1520, 0
    %1523 = vmatprep.subr.mxu0 0.0
    %1524 = vmatpush1.msra.mxu0 %v73
    %1525 = vmatprep.subr.mxu0 0.0
    %1526 = vmatpush1.msra.mxu0 %v74
    %1527 = vmatprep.subr.mxu0 0.0
    %1528 = vmatpush1.msra.mxu0 %v75
    %1529 = vmatprep.subr.mxu0 0.0
    %1530 = vmatpush1.msra.mxu0 %v76
    %1531 = vmatprep.subr.mxu0 0.0
    %1532 = vmatpush1.msra.mxu0 0.0
    %1533 = vmatprep.subr.mxu0 0.0
    %1534 = vmatpush1.msra.mxu0 0.0
    %1535 = vmatprep.subr.mxu0 0.0
    %1536 = vmatpush1.msra.mxu0 0.0
    %1537 = vmatprep.subr.mxu0 0.0
    %1538 = vmatpush1.msra.mxu0 0.0
    %1539 = vmatprep.subr.mxu0 0.0
    %1540 = vmatpush1.msra.mxu0 0.0
    %1541 = vmatprep.subr.mxu0 0.0
    %1542 = vmatpush1.msra.mxu0 0.0
    %1543 = vmatprep.subr.mxu0 0.0
    %1544 = vmatpush1.msra.mxu0 0.0
    %1545 = vmatprep.subr.mxu0 0.0
    %1546 = vmatpush1.msra.mxu0 0.0
    %1547 = vmatprep.subr.mxu0 0.0
    %1548 = vmatpush1.msra.mxu0 0.0
    %1549 = vmatprep.subr.mxu0 0.0
    %1550 = vmatpush1.msra.mxu0 0.0
    %1551 = vmatprep.subr.mxu0 0.0
    %1552 = vmatpush1.msra.mxu0 0.0
    %1553 = vmatprep.subr.mxu0 0.0
    %1554 = vmatpush1.msra.mxu0 0.0
    %1555 = vmatprep.subr.mxu0 0.0
    %1556 = vmatpush1.msra.mxu0 0.0
    %1557 = vmatprep.subr.mxu0 0.0
    %1558 = vmatpush1.msra.mxu0 0.0
    %1559 = vmatprep.subr.mxu0 0.0
    %1560 = vmatpush1.msra.mxu0 0.0
    %1561 = vmatprep.subr.mxu0 0.0
    %1562 = vmatpush1.msra.mxu0 0.0
    %1563 = vmatprep.subr.mxu0 0.0
    %1564 = vmatpush1.msra.mxu0 0.0
    %1565 = vmatprep.subr.mxu0 0.0
    %1566 = vmatpush1.msra.mxu0 0.0
    %1567 = vmatprep.subr.mxu0 0.0
    %1568 = vmatpush1.msra.mxu0 0.0
    %1569 = vmatprep.subr.mxu0 0.0
    %1570 = vmatpush1.msra.mxu0 0.0
    %1571 = vmatprep.subr.mxu0 0.0
    %1572 = vmatpush1.msra.mxu0 0.0
    %1573 = vmatprep.subr.mxu0 0.0
    %1574 = vmatpush1.msra.mxu0 0.0
    %1575 = vmatprep.subr.mxu0 0.0
    %1576 = vmatpush1.msra.mxu0 0.0
    %1577 = vmatprep.subr.mxu0 0.0
    %1578 = vmatpush1.msra.mxu0 0.0
    %1579 = vmatprep.subr.mxu0 0.0
    %1580 = vmatpush1.msra.mxu0 0.0
    %1581 = vmatprep.subr.mxu0 0.0
    %1582 = vmatpush1.msra.mxu0 0.0
    %1583 = vmatprep.subr.mxu0 0.0
    %1584 = vmatpush1.msra.mxu0 0.0
    %1585 = vmatprep.subr.mxu0 0.0
    %1586 = vmatpush1.msra.mxu0 0.0
    %1587 = vmatprep.mubr.f32.mxu0 0.0
    %1588 = vmatmul.mubr.f32.gmra.mrb[0].mxu0 %v1521
    %v1589 = vpop.f32.mrb[0].mxu0
    %v1590 = vadd.f32 0.0, %v1589
    %v1591 = vpop.f32.mrb[0].mxu0
    %1592 = vdwg.mxu0
    %v1593 = vadd.f32 %v1294, %v1590
    %v1594 = vxor.u32 %v1593, 2147483648
    %v1595 = vmul.f32 %v1594, 1.442695
    %v1596 = vpow.pop %v1595
    %v1597 = vadd.f32 %v1596, 1.0
    %v1598 = vrcp.pop %v1597
    %v1599 = vmul.f32 1.0, %v1598
    %v1600 = vmul.f32 %v1599, 2.0
    %v1601 = vsub.f32 %v1600, 1.0
    %v1602 = vmul.f32 %v1599, %v1517
    %1604 = vrot.lane.b32.xlu0 %v1601, 64
    %v1605 = vpop.permute.xlu0 %1604
    %v1607 = vmul.f32 %v1599, %v1605
    %1609 = vrot.lane.b32.xlu0 %v1607, 32
    %v1610 = vpop.permute.xlu0 %1609
    %v1612 = vadd.f32 %v1602, %v1610
    %v1613 = vtanh.pop %v1612
    %1615 = vrot.lane.b32.xlu0 %v1613, 64
    %v1616 = vpop.permute.xlu0 %1615
    %v1618 = vmul.f32 %v1599, %v1616
    %1620 = vrot.lane.b32.xlu0 %v1618, 64
    %v1621 = vpop.permute.xlu0 %1620
    %v1623 = vsel %vm97, %v1621, %v1516
    %v1624 = vsel %vm97, %v1612, %v1517
    %1626 = vrot.lane.b32.xlu0 %v1623, 96
    %v1627 = vpop.permute.xlu0 %1626
    %v1628 = vsel %vm111, %v1627, 0
    %1630 = vmatprep.subr.mxu0 0.0
    %1631 = vmatpush1.msra.mxu0 %v73
    %1632 = vmatprep.subr.mxu0 0.0
    %1633 = vmatpush1.msra.mxu0 %v74
    %1634 = vmatprep.subr.mxu0 0.0
    %1635 = vmatpush1.msra.mxu0 %v75
    %1636 = vmatprep.subr.mxu0 0.0
    %1637 = vmatpush1.msra.mxu0 %v76
    %1638 = vmatprep.subr.mxu0 0.0
    %1639 = vmatpush1.msra.mxu0 0.0
    %1640 = vmatprep.subr.mxu0 0.0
    %1641 = vmatpush1.msra.mxu0 0.0
    %1642 = vmatprep.subr.mxu0 0.0
    %1643 = vmatpush1.msra.mxu0 0.0
    %1644 = vmatprep.subr.mxu0 0.0
    %1645 = vmatpush1.msra.mxu0 0.0
    %1646 = vmatprep.subr.mxu0 0.0
    %1647 = vmatpush1.msra.mxu0 0.0
    %1648 = vmatprep.subr.mxu0 0.0
    %1649 = vmatpush1.msra.mxu0 0.0
    %1650 = vmatprep.subr.mxu0 0.0
    %1651 = vmatpush1.msra.mxu0 0.0
    %1652 = vmatprep.subr.mxu0 0.0
    %1653 = vmatpush1.msra.mxu0 0.0
    %1654 = vmatprep.subr.mxu0 0.0
    %1655 = vmatpush1.msra.mxu0 0.0
    %1656 = vmatprep.subr.mxu0 0.0
    %1657 = vmatpush1.msra.mxu0 0.0
    %1658 = vmatprep.subr.mxu0 0.0
    %1659 = vmatpush1.msra.mxu0 0.0
    %1660 = vmatprep.subr.mxu0 0.0
    %1661 = vmatpush1.msra.mxu0 0.0
    %1662 = vmatprep.subr.mxu0 0.0
    %1663 = vmatpush1.msra.mxu0 0.0
    %1664 = vmatprep.subr.mxu0 0.0
    %1665 = vmatpush1.msra.mxu0 0.0
    %1666 = vmatprep.subr.mxu0 0.0
    %1667 = vmatpush1.msra.mxu0 0.0
    %1668 = vmatprep.subr.mxu0 0.0
    %1669 = vmatpush1.msra.mxu0 0.0
    %1670 = vmatprep.subr.mxu0 0.0
    %1671 = vmatpush1.msra.mxu0 0.0
    %1672 = vmatprep.subr.mxu0 0.0
    %1673 = vmatpush1.msra.mxu0 0.0
    %1674 = vmatprep.subr.mxu0 0.0
    %1675 = vmatpush1.msra.mxu0 0.0
    %1676 = vmatprep.subr.mxu0 0.0
    %1677 = vmatpush1.msra.mxu0 0.0
    %1678 = vmatprep.subr.mxu0 0.0
    %1679 = vmatpush1.msra.mxu0 0.0
    %1680 = vmatprep.subr.mxu0 0.0
    %1681 = vmatpush1.msra.mxu0 0.0
    %1682 = vmatprep.subr.mxu0 0.0
    %1683 = vmatpush1.msra.mxu0 0.0
    %1684 = vmatprep.subr.mxu0 0.0
    %1685 = vmatpush1.msra.mxu0 0.0
    %1686 = vmatprep.subr.mxu0 0.0
    %1687 = vmatpush1.msra.mxu0 0.0
    %1688 = vmatprep.subr.mxu0 0.0
    %1689 = vmatpush1.msra.mxu0 0.0
    %1690 = vmatprep.subr.mxu0 0.0
    %1691 = vmatpush1.msra.mxu0 0.0
    %1692 = vmatprep.subr.mxu0 0.0
    %1693 = vmatpush1.msra.mxu0 0.0
    %1694 = vmatprep.mubr.f32.mxu0 0.0
    %1695 = vmatmul.mubr.f32.gmra.mrb[0].mxu0 %v1628
    %v1696 = vpop.f32.mrb[0].mxu0
    %v1697 = vadd.f32 0.0, %v1696
    %v1698 = vpop.f32.mrb[0].mxu0
    %1699 = vdwg.mxu0
    %v1700 = vadd.f32 %v1289, %v1697
    %v1701 = vxor.u32 %v1700, 2147483648
    %v1702 = vmul.f32 %v1701, 1.442695
    %v1703 = vpow.pop %v1702
    %v1704 = vadd.f32 %v1703, 1.0
    %v1705 = vrcp.pop %v1704
    %v1706 = vmul.f32 1.0, %v1705
    %v1707 = vmul.f32 %v1706, 2.0
    %v1708 = vsub.f32 %v1707, 1.0
    %v1709 = vmul.f32 %v1706, %v1624
    %1711 = vrot.lane.b32.xlu0 %v1708, 64
    %v1712 = vpop.permute.xlu0 %1711
    %v1714 = vmul.f32 %v1706, %v1712
    %1716 = vrot.lane.b32.xlu0 %v1714, 32
    %v1717 = vpop.permute.xlu0 %1716
    %v1719 = vadd.f32 %v1709, %v1717
    %v1720 = vtanh.pop %v1719
    %1722 = vrot.lane.b32.xlu0 %v1720, 64
    %v1723 = vpop.permute.xlu0 %1722
    %v1725 = vmul.f32 %v1706, %v1723
    %1727 = vrot.lane.b32.xlu0 %v1725, 64
    %v1728 = vpop.permute.xlu0 %1727
    %v1730 = vsel %vm96, %v1728, %v1623
    %v1731 = vsel %vm96, %v1719, %v1624
    %1733 = vrot.lane.b32.xlu0 %v1730, 96
    %v1734 = vpop.permute.xlu0 %1733
    %v1735 = vsel %vm111, %v1734, 0
    %1737 = vmatprep.subr.mxu0 0.0
    %1738 = vmatpush1.msra.mxu0 %v73
    %1739 = vmatprep.subr.mxu0 0.0
    %1740 = vmatpush1.msra.mxu0 %v74
    %1741 = vmatprep.subr.mxu0 0.0
    %1742 = vmatpush1.msra.mxu0 %v75
    %1743 = vmatprep.subr.mxu0 0.0
    %1744 = vmatpush1.msra.mxu0 %v76
    %1745 = vmatprep.subr.mxu0 0.0
    %1746 = vmatpush1.msra.mxu0 0.0
    %1747 = vmatprep.subr.mxu0 0.0
    %1748 = vmatpush1.msra.mxu0 0.0
    %1749 = vmatprep.subr.mxu0 0.0
    %1750 = vmatpush1.msra.mxu0 0.0
    %1751 = vmatprep.subr.mxu0 0.0
    %1752 = vmatpush1.msra.mxu0 0.0
    %1753 = vmatprep.subr.mxu0 0.0
    %1754 = vmatpush1.msra.mxu0 0.0
    %1755 = vmatprep.subr.mxu0 0.0
    %1756 = vmatpush1.msra.mxu0 0.0
    %1757 = vmatprep.subr.mxu0 0.0
    %1758 = vmatpush1.msra.mxu0 0.0
    %1759 = vmatprep.subr.mxu0 0.0
    %1760 = vmatpush1.msra.mxu0 0.0
    %1761 = vmatprep.subr.mxu0 0.0
    %1762 = vmatpush1.msra.mxu0 0.0
    %1763 = vmatprep.subr.mxu0 0.0
    %1764 = vmatpush1.msra.mxu0 0.0
    %1765 = vmatprep.subr.mxu0 0.0
    %1766 = vmatpush1.msra.mxu0 0.0
    %1767 = vmatprep.subr.mxu0 0.0
    %1768 = vmatpush1.msra.mxu0 0.0
    %1769 = vmatprep.subr.mxu0 0.0
    %1770 = vmatpush1.msra.mxu0 0.0
    %1771 = vmatprep.subr.mxu0 0.0
    %1772 = vmatpush1.msra.mxu0 0.0
    %1773 = vmatprep.subr.mxu0 0.0
    %1774 = vmatpush1.msra.mxu0 0.0
    %1775 = vmatprep.subr.mxu0 0.0
    %1776 = vmatpush1.msra.mxu0 0.0
    %1777 = vmatprep.subr.mxu0 0.0
    %1778 = vmatpush1.msra.mxu0 0.0
    %1779 = vmatprep.subr.mxu0 0.0
    %1780 = vmatpush1.msra.mxu0 0.0
    %1781 = vmatprep.subr.mxu0 0.0
    %1782 = vmatpush1.msra.mxu0 0.0
    %1783 = vmatprep.subr.mxu0 0.0
    %1784 = vmatpush1.msra.mxu0 0.0
    %1785 = vmatprep.subr.mxu0 0.0
    %1786 = vmatpush1.msra.mxu0 0.0
    %1787 = vmatprep.subr.mxu0 0.0
    %1788 = vmatpush1.msra.mxu0 0.0
    %1789 = vmatprep.subr.mxu0 0.0
    %1790 = vmatpush1.msra.mxu0 0.0
    %1791 = vmatprep.subr.mxu0 0.0
    %1792 = vmatpush1.msra.mxu0 0.0
    %1793 = vmatprep.subr.mxu0 0.0
    %1794 = vmatpush1.msra.mxu0 0.0
    %1795 = vmatprep.subr.mxu0 0.0
    %1796 = vmatpush1.msra.mxu0 0.0
    %1797 = vmatprep.subr.mxu0 0.0
    %1798 = vmatpush1.msra.mxu0 0.0
    %1799 = vmatprep.subr.mxu0 0.0
    %1800 = vmatpush1.msra.mxu0 0.0
    %1801 = vmatprep.mubr.f32.mxu0 0.0
    %1802 = vmatmul.mubr.f32.gmra.mrb[0].mxu0 %v1735
    %v1803 = vpop.f32.mrb[0].mxu0
    %v1804 = vadd.f32 0.0, %v1803
    %v1805 = vpop.f32.mrb[0].mxu0
    %1806 = vdwg.mxu0
    %v1807 = vadd.f32 %v1284, %v1804
    %v1808 = vxor.u32 %v1807, 2147483648
    %v1809 = vmul.f32 %v1808, 1.442695
    %v1810 = vpow.pop %v1809
    %v1811 = vadd.f32 %v1810, 1.0
    %v1812 = vrcp.pop %v1811
    %v1813 = vmul.f32 1.0, %v1812
    %v1814 = vmul.f32 %v1813, 2.0
    %v1815 = vsub.f32 %v1814, 1.0
    %v1816 = vmul.f32 %v1813, %v1731
    %1818 = vrot.lane.b32.xlu0 %v1815, 64
    %v1819 = vpop.permute.xlu0 %1818
    %v1821 = vmul.f32 %v1813, %v1819
    %1823 = vrot.lane.b32.xlu0 %v1821, 32
    %v1824 = vpop.permute.xlu0 %1823
    %v1826 = vadd.f32 %v1816, %v1824
    %v1827 = vtanh.pop %v1826
    %1829 = vrot.lane.b32.xlu0 %v1827, 64
    %v1830 = vpop.permute.xlu0 %1829
    %v1832 = vmul.f32 %v1813, %v1830
    %1834 = vrot.lane.b32.xlu0 %v1832, 64
    %v1835 = vpop.permute.xlu0 %1834
    %v1837 = vsel %vm95, %v1835, %v1730
    %v1838 = vsel %vm95, %v1826, %v1731
    %1840 = vrot.lane.b32.xlu0 %v1837, 96
    %v1841 = vpop.permute.xlu0 %1840
    %v1842 = vsel %vm111, %v1841, 0
    %1844 = vmatprep.subr.mxu0 0.0
    %1845 = vmatpush1.msra.mxu0 %v73
    %1846 = vmatprep.subr.mxu0 0.0
    %1847 = vmatpush1.msra.mxu0 %v74
    %1848 = vmatprep.subr.mxu0 0.0
    %1849 = vmatpush1.msra.mxu0 %v75
    %1850 = vmatprep.subr.mxu0 0.0
    %1851 = vmatpush1.msra.mxu0 %v76
    %1852 = vmatprep.subr.mxu0 0.0
    %1853 = vmatpush1.msra.mxu0 0.0
    %1854 = vmatprep.subr.mxu0 0.0
    %1855 = vmatpush1.msra.mxu0 0.0
    %1856 = vmatprep.subr.mxu0 0.0
    %1857 = vmatpush1.msra.mxu0 0.0
    %1858 = vmatprep.subr.mxu0 0.0
    %1859 = vmatpush1.msra.mxu0 0.0
    %1860 = vmatprep.subr.mxu0 0.0
    %1861 = vmatpush1.msra.mxu0 0.0
    %1862 = vmatprep.subr.mxu0 0.0
    %1863 = vmatpush1.msra.mxu0 0.0
    %1864 = vmatprep.subr.mxu0 0.0
    %1865 = vmatpush1.msra.mxu0 0.0
    %1866 = vmatprep.subr.mxu0 0.0
    %1867 = vmatpush1.msra.mxu0 0.0
    %1868 = vmatprep.subr.mxu0 0.0
    %1869 = vmatpush1.msra.mxu0 0.0
    %1870 = vmatprep.subr.mxu0 0.0
    %1871 = vmatpush1.msra.mxu0 0.0
    %1872 = vmatprep.subr.mxu0 0.0
    %1873 = vmatpush1.msra.mxu0 0.0
    %1874 = vmatprep.subr.mxu0 0.0
    %1875 = vmatpush1.msra.mxu0 0.0
    %1876 = vmatprep.subr.mxu0 0.0
    %1877 = vmatpush1.msra.mxu0 0.0
    %1878 = vmatprep.subr.mxu0 0.0
    %1879 = vmatpush1.msra.mxu0 0.0
    %1880 = vmatprep.subr.mxu0 0.0
    %1881 = vmatpush1.msra.mxu0 0.0
    %1882 = vmatprep.subr.mxu0 0.0
    %1883 = vmatpush1.msra.mxu0 0.0
    %1884 = vmatprep.subr.mxu0 0.0
    %1885 = vmatpush1.msra.mxu0 0.0
    %1886 = vmatprep.subr.mxu0 0.0
    %1887 = vmatpush1.msra.mxu0 0.0
    %1888 = vmatprep.subr.mxu0 0.0
    %1889 = vmatpush1.msra.mxu0 0.0
    %1890 = vmatprep.subr.mxu0 0.0
    %1891 = vmatpush1.msra.mxu0 0.0
    %1892 = vmatprep.subr.mxu0 0.0
    %1893 = vmatpush1.msra.mxu0 0.0
    %1894 = vmatprep.subr.mxu0 0.0
    %1895 = vmatpush1.msra.mxu0 0.0
    %1896 = vmatprep.subr.mxu0 0.0
    %1897 = vmatpush1.msra.mxu0 0.0
    %1898 = vmatprep.subr.mxu0 0.0
    %1899 = vmatpush1.msra.mxu0 0.0
    %1900 = vmatprep.subr.mxu0 0.0
    %1901 = vmatpush1.msra.mxu0 0.0
    %1902 = vmatprep.subr.mxu0 0.0
    %1903 = vmatpush1.msra.mxu0 0.0
    %1904 = vmatprep.subr.mxu0 0.0
    %1905 = vmatpush1.msra.mxu0 0.0
    %1906 = vmatprep.subr.mxu0 0.0
    %1907 = vmatpush1.msra.mxu0 0.0
    %1908 = vmatprep.mubr.f32.mxu0 0.0
    %1909 = vmatmul.mubr.f32.gmra.mrb[0].mxu0 %v1842
    %v1910 = vpop.f32.mrb[0].mxu0
    %v1911 = vadd.f32 0.0, %v1910
    %v1912 = vpop.f32.mrb[0].mxu0
    %1913 = vdwg.mxu0
    %v1914 = vadd.f32 %v1279, %v1911
    %v1915 = vxor.u32 %v1914, 2147483648
    %v1916 = vmul.f32 %v1915, 1.442695
    %v1917 = vpow.pop %v1916
    %v1918 = vadd.f32 %v1917, 1.0
    %v1919 = vrcp.pop %v1918
    %v1920 = vmul.f32 1.0, %v1919
    %v1921 = vmul.f32 %v1920, 2.0
    %v1922 = vsub.f32 %v1921, 1.0
    %v1923 = vmul.f32 %v1920, %v1838
    %1925 = vrot.lane.b32.xlu0 %v1922, 64
    %v1926 = vpop.permute.xlu0 %1925
    %v1928 = vmul.f32 %v1920, %v1926
    %1930 = vrot.lane.b32.xlu0 %v1928, 32
    %v1931 = vpop.permute.xlu0 %1930
    %v1933 = vadd.f32 %v1923, %v1931
    %v1934 = vtanh.pop %v1933
    %1936 = vrot.lane.b32.xlu0 %v1934, 64
    %v1937 = vpop.permute.xlu0 %1936
    %v1939 = vmul.f32 %v1920, %v1937
    %1941 = vrot.lane.b32.xlu0 %v1939, 64
    %v1942 = vpop.permute.xlu0 %1941
    %v1944 = vsel %vm94, %v1942, %v1837
    %v1945 = vsel %vm94, %v1933, %v1838
    %1947 = vrot.lane.b32.xlu0 %v1944, 96
    %v1948 = vpop.permute.xlu0 %1947
    %v1949 = vsel %vm111, %v1948, 0
    %1951 = vmatprep.subr.mxu0 0.0
    %1952 = vmatpush1.msra.mxu0 %v73
    %1953 = vmatprep.subr.mxu0 0.0
    %1954 = vmatpush1.msra.mxu0 %v74
    %1955 = vmatprep.subr.mxu0 0.0
    %1956 = vmatpush1.msra.mxu0 %v75
    %1957 = vmatprep.subr.mxu0 0.0
    %1958 = vmatpush1.msra.mxu0 %v76
    %1959 = vmatprep.subr.mxu0 0.0
    %1960 = vmatpush1.msra.mxu0 0.0
    %1961 = vmatprep.subr.mxu0 0.0
    %1962 = vmatpush1.msra.mxu0 0.0
    %1963 = vmatprep.subr.mxu0 0.0
    %1964 = vmatpush1.msra.mxu0 0.0
    %1965 = vmatprep.subr.mxu0 0.0
    %1966 = vmatpush1.msra.mxu0 0.0
    %1967 = vmatprep.subr.mxu0 0.0
    %1968 = vmatpush1.msra.mxu0 0.0
    %1969 = vmatprep.subr.mxu0 0.0
    %1970 = vmatpush1.msra.mxu0 0.0
    %1971 = vmatprep.subr.mxu0 0.0
    %1972 = vmatpush1.msra.mxu0 0.0
    %1973 = vmatprep.subr.mxu0 0.0
    %1974 = vmatpush1.msra.mxu0 0.0
    %1975 = vmatprep.subr.mxu0 0.0
    %1976 = vmatpush1.msra.mxu0 0.0
    %1977 = vmatprep.subr.mxu0 0.0
    %1978 = vmatpush1.msra.mxu0 0.0
    %1979 = vmatprep.subr.mxu0 0.0
    %1980 = vmatpush1.msra.mxu0 0.0
    %1981 = vmatprep.subr.mxu0 0.0
    %1982 = vmatpush1.msra.mxu0 0.0
    %1983 = vmatprep.subr.mxu0 0.0
    %1984 = vmatpush1.msra.mxu0 0.0
    %1985 = vmatprep.subr.mxu0 0.0
    %1986 = vmatpush1.msra.mxu0 0.0
    %1987 = vmatprep.subr.mxu0 0.0
    %1988 = vmatpush1.msra.mxu0 0.0
    %1989 = vmatprep.subr.mxu0 0.0
    %1990 = vmatpush1.msra.mxu0 0.0
    %1991 = vmatprep.subr.mxu0 0.0
    %1992 = vmatpush1.msra.mxu0 0.0
    %1993 = vmatprep.subr.mxu0 0.0
    %1994 = vmatpush1.msra.mxu0 0.0
    %1995 = vmatprep.subr.mxu0 0.0
    %1996 = vmatpush1.msra.mxu0 0.0
    %1997 = vmatprep.subr.mxu0 0.0
    %1998 = vmatpush1.msra.mxu0 0.0
    %1999 = vmatprep.subr.mxu0 0.0
    %2000 = vmatpush1.msra.mxu0 0.0
    %2001 = vmatprep.subr.mxu0 0.0
    %2002 = vmatpush1.msra.mxu0 0.0
    %2003 = vmatprep.subr.mxu0 0.0
    %2004 = vmatpush1.msra.mxu0 0.0
    %2005 = vmatprep.subr.mxu0 0.0
    %2006 = vmatpush1.msra.mxu0 0.0
    %2007 = vmatprep.subr.mxu0 0.0
    %2008 = vmatpush1.msra.mxu0 0.0
    %2009 = vmatprep.subr.mxu0 0.0
    %2010 = vmatpush1.msra.mxu0 0.0
    %2011 = vmatprep.subr.mxu0 0.0
    %2012 = vmatpush1.msra.mxu0 0.0
    %2013 = vmatprep.subr.mxu0 0.0
    %2014 = vmatpush1.msra.mxu0 0.0
    %2015 = vmatprep.mubr.f32.mxu0 0.0
    %2016 = vmatmul.mubr.f32.gmra.mrb[0].mxu0 %v1949
    %v2017 = vpop.f32.mrb[0].mxu0
    %v2018 = vadd.f32 0.0, %v2017
    %v2019 = vpop.f32.mrb[0].mxu0
    %2020 = vdwg.mxu0
    %v2021 = vadd.f32 %v1274, %v2018
    %v2022 = vxor.u32 %v2021, 2147483648
    %v2023 = vmul.f32 %v2022, 1.442695
    %v2024 = vpow.pop %v2023
    %v2025 = vadd.f32 %v2024, 1.0
    %v2026 = vrcp.pop %v2025
    %v2027 = vmul.f32 1.0, %v2026
    %v2028 = vmul.f32 %v2027, 2.0
    %v2029 = vsub.f32 %v2028, 1.0
    %v2030 = vmul.f32 %v2027, %v1945
    %2032 = vrot.lane.b32.xlu0 %v2029, 64
    %v2033 = vpop.permute.xlu0 %2032
    %v2035 = vmul.f32 %v2027, %v2033
    %2037 = vrot.lane.b32.xlu0 %v2035, 32
    %v2038 = vpop.permute.xlu0 %2037
    %v2040 = vadd.f32 %v2030, %v2038
    %v2041 = vtanh.pop %v2040
    %2043 = vrot.lane.b32.xlu0 %v2041, 64
    %v2044 = vpop.permute.xlu0 %2043
    %v2046 = vmul.f32 %v2027, %v2044
    %2048 = vrot.lane.b32.xlu0 %v2046, 64
    %v2049 = vpop.permute.xlu0 %2048
    %v2051 = vsel %vm93, %v2049, %v1944
    %v2052 = vsel %vm93, %v2040, %v1945
    %2054 = vrot.lane.b32.xlu0 %v2051, 96
    %v2055 = vpop.permute.xlu0 %2054
    %v2056 = vsel %vm111, %v2055, 0
    %2058 = vmatprep.subr.mxu0 0.0
    %2059 = vmatpush1.msra.mxu0 %v73
    %2060 = vmatprep.subr.mxu0 0.0
    %2061 = vmatpush1.msra.mxu0 %v74
    %2062 = vmatprep.subr.mxu0 0.0
    %2063 = vmatpush1.msra.mxu0 %v75
    %2064 = vmatprep.subr.mxu0 0.0
    %2065 = vmatpush1.msra.mxu0 %v76
    %2066 = vmatprep.subr.mxu0 0.0
    %2067 = vmatpush1.msra.mxu0 0.0
    %2068 = vmatprep.subr.mxu0 0.0
    %2069 = vmatpush1.msra.mxu0 0.0
    %2070 = vmatprep.subr.mxu0 0.0
    %2071 = vmatpush1.msra.mxu0 0.0
    %2072 = vmatprep.subr.mxu0 0.0
    %2073 = vmatpush1.msra.mxu0 0.0
    %2074 = vmatprep.subr.mxu0 0.0
    %2075 = vmatpush1.msra.mxu0 0.0
    %2076 = vmatprep.subr.mxu0 0.0
    %2077 = vmatpush1.msra.mxu0 0.0
    %2078 = vmatprep.subr.mxu0 0.0
    %2079 = vmatpush1.msra.mxu0 0.0
    %2080 = vmatprep.subr.mxu0 0.0
    %2081 = vmatpush1.msra.mxu0 0.0
    %2082 = vmatprep.subr.mxu0 0.0
    %2083 = vmatpush1.msra.mxu0 0.0
    %2084 = vmatprep.subr.mxu0 0.0
    %2085 = vmatpush1.msra.mxu0 0.0
    %2086 = vmatprep.subr.mxu0 0.0
    %2087 = vmatpush1.msra.mxu0 0.0
    %2088 = vmatprep.subr.mxu0 0.0
    %2089 = vmatpush1.msra.mxu0 0.0
    %2090 = vmatprep.subr.mxu0 0.0
    %2091 = vmatpush1.msra.mxu0 0.0
    %2092 = vmatprep.subr.mxu0 0.0
    %2093 = vmatpush1.msra.mxu0 0.0
    %2094 = vmatprep.subr.mxu0 0.0
    %2095 = vmatpush1.msra.mxu0 0.0
    %2096 = vmatprep.subr.mxu0 0.0
    %2097 = vmatpush1.msra.mxu0 0.0
    %2098 = vmatprep.subr.mxu0 0.0
    %2099 = vmatpush1.msra.mxu0 0.0
    %2100 = vmatprep.subr.mxu0 0.0
    %2101 = vmatpush1.msra.mxu0 0.0
    %2102 = vmatprep.subr.mxu0 0.0
    %2103 = vmatpush1.msra.mxu0 0.0
    %2104 = vmatprep.subr.mxu0 0.0
    %2105 = vmatpush1.msra.mxu0 0.0
    %2106 = vmatprep.subr.mxu0 0.0
    %2107 = vmatpush1.msra.mxu0 0.0
    %2108 = vmatprep.subr.mxu0 0.0
    %2109 = vmatpush1.msra.mxu0 0.0
    %2110 = vmatprep.subr.mxu0 0.0
    %2111 = vmatpush1.msra.mxu0 0.0
    %2112 = vmatprep.subr.mxu0 0.0
    %2113 = vmatpush1.msra.mxu0 0.0
    %2114 = vmatprep.subr.mxu0 0.0
    %2115 = vmatpush1.msra.mxu0 0.0
    %2116 = vmatprep.subr.mxu0 0.0
    %2117 = vmatpush1.msra.mxu0 0.0
    %2118 = vmatprep.subr.mxu0 0.0
    %2119 = vmatpush1.msra.mxu0 0.0
    %2120 = vmatprep.subr.mxu0 0.0
    %2121 = vmatpush1.msra.mxu0 0.0
    %2122 = vmatprep.mubr.f32.mxu0 0.0
    %2123 = vmatmul.mubr.f32.gmra.mrb[0].mxu0 %v2056
    %v2124 = vpop.f32.mrb[0].mxu0
    %v2125 = vadd.f32 0.0, %v2124
    %v2126 = vpop.f32.mrb[0].mxu0
    %2127 = vdwg.mxu0
    %v2128 = vadd.f32 %v1269, %v2125
    %v2129 = vxor.u32 %v2128, 2147483648
    %v2130 = vmul.f32 %v2129, 1.442695
    %v2131 = vpow.pop %v2130
    %v2132 = vadd.f32 %v2131, 1.0
    %v2133 = vrcp.pop %v2132
    %v2134 = vmul.f32 1.0, %v2133
    %v2135 = vmul.f32 %v2134, 2.0
    %v2136 = vsub.f32 %v2135, 1.0
    %v2137 = vmul.f32 %v2134, %v2052
    %2139 = vrot.lane.b32.xlu0 %v2136, 64
    %v2140 = vpop.permute.xlu0 %2139
    %v2142 = vmul.f32 %v2134, %v2140
    %2144 = vrot.lane.b32.xlu0 %v2142, 32
    %v2145 = vpop.permute.xlu0 %2144
    %v2147 = vadd.f32 %v2137, %v2145
    %v2148 = vtanh.pop %v2147
    %2150 = vrot.lane.b32.xlu0 %v2148, 64
    %v2151 = vpop.permute.xlu0 %2150
    %v2153 = vmul.f32 %v2134, %v2151
    %2155 = vrot.lane.b32.xlu0 %v2153, 64
    %v2156 = vpop.permute.xlu0 %2155
    %v2158 = vsel %vm92, %v2156, %v2051
    %2160 = vrot.lane.b32.xlu0 %v2158, 96
    %v2161 = vpop.permute.xlu0 %2160
    %v2162 = vsel %vm111, %v2161, 0
    %2164 = vmatprep.subr.mxu0 0.0
    %2165 = vmatpush1.msra.mxu0 %v79
    %2166 = vmatprep.subr.mxu0 0.0
    %2167 = vmatpush1.msra.mxu0 %v80
    %2168 = vmatprep.subr.mxu0 0.0
    %2169 = vmatpush1.msra.mxu0 %v81
    %2170 = vmatprep.subr.mxu0 0.0
    %2171 = vmatpush1.msra.mxu0 %v82
    %2172 = vmatprep.subr.mxu0 0.0
    %2173 = vmatpush1.msra.mxu0 0.0
    %2174 = vmatprep.subr.mxu0 0.0
    %2175 = vmatpush1.msra.mxu0 0.0
    %2176 = vmatprep.subr.mxu0 0.0
    %2177 = vmatpush1.msra.mxu0 0.0
    %2178 = vmatprep.subr.mxu0 0.0
    %2179 = vmatpush1.msra.mxu0 0.0
    %2180 = vmatprep.subr.mxu0 0.0
    %2181 = vmatpush1.msra.mxu0 0.0
    %2182 = vmatprep.subr.mxu0 0.0
    %2183 = vmatpush1.msra.mxu0 0.0
    %2184 = vmatprep.subr.mxu0 0.0
    %2185 = vmatpush1.msra.mxu0 0.0
    %2186 = vmatprep.subr.mxu0 0.0
    %2187 = vmatpush1.msra.mxu0 0.0
    %2188 = vmatprep.subr.mxu0 0.0
    %2189 = vmatpush1.msra.mxu0 0.0
    %2190 = vmatprep.subr.mxu0 0.0
    %2191 = vmatpush1.msra.mxu0 0.0
    %2192 = vmatprep.subr.mxu0 0.0
    %2193 = vmatpush1.msra.mxu0 0.0
    %2194 = vmatprep.subr.mxu0 0.0
    %2195 = vmatpush1.msra.mxu0 0.0
    %2196 = vmatprep.subr.mxu0 0.0
    %2197 = vmatpush1.msra.mxu0 0.0
    %2198 = vmatprep.subr.mxu0 0.0
    %2199 = vmatpush1.msra.mxu0 0.0
    %2200 = vmatprep.subr.mxu0 0.0
    %2201 = vmatpush1.msra.mxu0 0.0
    %2202 = vmatprep.subr.mxu0 0.0
    %2203 = vmatpush1.msra.mxu0 0.0
    %2204 = vmatprep.subr.mxu0 0.0
    %2205 = vmatpush1.msra.mxu0 0.0
    %2206 = vmatprep.subr.mxu0 0.0
    %2207 = vmatpush1.msra.mxu0 0.0
    %2208 = vmatprep.subr.mxu0 0.0
    %2209 = vmatpush1.msra.mxu0 0.0
    %2210 = vmatprep.subr.mxu0 0.0
    %2211 = vmatpush1.msra.mxu0 0.0
    %2212 = vmatprep.subr.mxu0 0.0
    %2213 = vmatpush1.msra.mxu0 0.0
    %2214 = vmatprep.subr.mxu0 0.0
    %2215 = vmatpush1.msra.mxu0 0.0
    %2216 = vmatprep.subr.mxu0 0.0
    %2217 = vmatpush1.msra.mxu0 0.0
    %2218 = vmatprep.subr.mxu0 0.0
    %2219 = vmatpush1.msra.mxu0 0.0
    %2220 = vmatprep.subr.mxu0 0.0
    %2221 = vmatpush1.msra.mxu0 0.0
    %2222 = vmatprep.subr.mxu0 0.0
    %2223 = vmatpush1.msra.mxu0 0.0
    %2224 = vmatprep.subr.mxu0 0.0
    %2225 = vmatpush1.msra.mxu0 0.0
    %2226 = vmatprep.subr.mxu0 0.0
    %2227 = vmatpush1.msra.mxu0 0.0
    %2228 = vmatprep.mubr.f32.mxu0 0.0
    %2229 = vmatmul.mubr.f32.gmra.mrb[0].mxu0 %v2162
    %v2230 = vpop.f32.mrb[0].mxu0
    %v2231 = vadd.f32 0.0, %v2230
    %v2232 = vpop.f32.mrb[0].mxu0
    %2233 = vdwg.mxu0
    %2234 = vrot.lane.b32.xlu0 %v84, 32
    %v2235 = vpop.permute.xlu0 %2234
    %vm2236 = vcmask 31744
    %v2237 = vsel %vm2236, %v2235, 0
    %vm2239 = vcmask 1043456
    %v2241 = vsel %vm2239, %v78, 0
    %2243 = vmatprep.subr.mxu0 0.0
    %2244 = vmatpush1.msra.mxu0 %v2241
    %2245 = vmatprep.subr.mxu0 0.0
    %2246 = vmatpush1.msra.mxu0 0.0
    %2247 = vmatprep.subr.mxu0 0.0
    %2248 = vmatpush1.msra.mxu0 0.0
    %2249 = vmatprep.subr.mxu0 0.0
    %2250 = vmatpush1.msra.mxu0 0.0
    %2251 = vmatprep.subr.mxu0 0.0
    %2252 = vmatpush1.msra.mxu0 0.0
    %2253 = vmatprep.subr.mxu0 0.0
    %2254 = vmatpush1.msra.mxu0 0.0
    %2255 = vmatprep.subr.mxu0 0.0
    %2256 = vmatpush1.msra.mxu0 0.0
    %2257 = vmatprep.subr.mxu0 0.0
    %2258 = vmatpush1.msra.mxu0 0.0
    %2259 = vmatprep.subr.mxu0 0.0
    %2260 = vmatpush1.msra.mxu0 0.0
    %2261 = vmatprep.subr.mxu0 0.0
    %2262 = vmatpush1.msra.mxu0 0.0
    %2263 = vmatprep.subr.mxu0 0.0
    %2264 = vmatpush1.msra.mxu0 0.0
    %2265 = vmatprep.subr.mxu0 0.0
    %2266 = vmatpush1.msra.mxu0 0.0
    %2267 = vmatprep.subr.mxu0 0.0
    %2268 = vmatpush1.msra.mxu0 0.0
    %2269 = vmatprep.subr.mxu0 0.0
    %2270 = vmatpush1.msra.mxu0 0.0
    %2271 = vmatprep.subr.mxu0 0.0
    %2272 = vmatpush1.msra.mxu0 0.0
    %2273 = vmatprep.subr.mxu0 0.0
    %2274 = vmatpush1.msra.mxu0 0.0
    %2275 = vmatprep.subr.mxu0 0.0
    %2276 = vmatpush1.msra.mxu0 0.0
    %2277 = vmatprep.subr.mxu0 0.0
    %2278 = vmatpush1.msra.mxu0 0.0
    %2279 = vmatprep.subr.mxu0 0.0
    %2280 = vmatpush1.msra.mxu0 0.0
    %2281 = vmatprep.subr.mxu0 0.0
    %2282 = vmatpush1.msra.mxu0 0.0
    %2283 = vmatprep.subr.mxu0 0.0
    %2284 = vmatpush1.msra.mxu0 0.0
    %2285 = vmatprep.subr.mxu0 0.0
    %2286 = vmatpush1.msra.mxu0 0.0
    %2287 = vmatprep.subr.mxu0 0.0
    %2288 = vmatpush1.msra.mxu0 0.0
    %2289 = vmatprep.subr.mxu0 0.0
    %2290 = vmatpush1.msra.mxu0 0.0
    %2291 = vmatprep.subr.mxu0 0.0
    %2292 = vmatpush1.msra.mxu0 0.0
    %2293 = vmatprep.subr.mxu0 0.0
    %2294 = vmatpush1.msra.mxu0 0.0
    %2295 = vmatprep.subr.mxu0 0.0
    %2296 = vmatpush1.msra.mxu0 0.0
    %2297 = vmatprep.subr.mxu0 0.0
    %2298 = vmatpush1.msra.mxu0 0.0
    %2299 = vmatprep.subr.mxu0 0.0
    %2300 = vmatpush1.msra.mxu0 0.0
    %2301 = vmatprep.subr.mxu0 0.0
    %2302 = vmatpush1.msra.mxu0 0.0
    %2303 = vmatprep.subr.mxu0 0.0
    %2304 = vmatpush1.msra.mxu0 0.0
    %2305 = vmatprep.subr.mxu0 0.0
    %2306 = vmatpush1.msra.mxu0 0.0
    %2307 = vmatprep.mubr.f32.mxu0 0.0
    %2308 = vmatmul.mubr.f32.gmra.mrb[0].mxu0 %v2237
    %v2309 = vpop.f32.mrb[0].mxu0
    %v2310 = vadd.f32 %v2231, %v2309
    %v2311 = vpop.f32.mrb[0].mxu0
    %2312 = vdwg.mxu0
    %v2313 = vadd.f32 %v2310, %v83
    %vm2314 = vcmask 23552
    %2315 = vst.msk [vmem:[%s2] sm:$0xff] %vm2314, %v2313
    // Predicated region
    $region18: #{tpu_custom_call.1} parent=1 // pred_check
      _
    $region19: #{tpu_custom_call.1} parent=1 // pred_check_branch
      %2317 = sbr.rel (0) target = $region21
    $region20: #{tpu_custom_call.1} parent=1 // pred_region
      _
    $region21: #{tpu_custom_call.1} parent=1 // pred_fallthru
      _
    // Predicated region
    $region22: #{tpu_custom_call.1} parent=1 // pred_check
      _
    $region23: #{tpu_custom_call.1} parent=1 // pred_check_branch
      %2319 = sbr.rel (0) target = $region25
    $region24: #{tpu_custom_call.1} parent=1 // pred_region
      _
    $region25: #{tpu_custom_call.1} parent=1 // pred_fallthru
      _
    %2320 = vsyncpa [#allocation3], 1
    %2321 = vsyncpa [#allocation5], 1

</llo_original>
